<compile_context>
chip_gen: v7x
topology: tpu7x:2x2x1
jax: 0.10.0
libtpu: 0.0.40
codegen_flags: <defaults>
</compile_context>

<pallas_src>
import functools

import jax
import jax.numpy as jnp
from jax import lax
from jax.experimental import pallas as pl
from jax.experimental.pallas import tpu as pltpu


def _round_up(x, m):
    return ((x + m - 1) // m) * m


# ----------------------------------------------------------------------------
# Fused kernel: DMA gather + (3 convs as one im2col matmul) + ReLU + max-pool
#               + 4-layer MLP head, one batch block per grid step.
# ----------------------------------------------------------------------------
def _textcnn_kernel(tok_ref,                     # SMEM (B_pad*S,) i32  (prefetch)
                    table_ref,                   # HBM  (V, Dp) f32
                    wc_ref, bc_ref,              # VMEM (k_max*Dp, F3p), (1, F3p)
                    w0_ref, b0_ref, w1_ref, b1_ref,
                    w2_ref, b2_ref, w3_ref, b3_ref,
                    out_ref,                     # VMEM (TB, Cp) f32
                    emb_buf, gather_sems,        # scratch
                    *, TB, S, F, filter_sizes, mm_dtype):
    n_rows = TB * S
    V, Dp = table_ref.shape
    F3p = wc_ref.shape[1]
    k_max = wc_ref.shape[0] // Dp
    nb = len(filter_sizes)
    base = pl.program_id(0) * n_rows

    # ---- scalar-prefetch-driven DMA gather of the embedding rows ------------
    @pl.loop(0, n_rows)
    def _issue(r):
        tok = tok_ref[base + r]
        tok = jnp.minimum(jnp.maximum(tok, 0), V - 1)        # clamp: no OOB DMA
        pltpu.make_async_copy(table_ref.at[pl.ds(tok, 1)],
                              emb_buf.at[pl.ds(r, 1)],
                              gather_sems.at[r]).start()

    @pl.loop(0, n_rows)
    def _wait(r):
        pltpu.make_async_copy(table_ref.at[pl.ds(0, 1)],
                              emb_buf.at[pl.ds(r, 1)],
                              gather_sems.at[r]).wait()

    emb = emb_buf[...]                                       # (n_rows, Dp) f32

    # ---- im2col windows via XLU sublane rolls; ONE matmul for all widths ----
    # rolled copy j puts emb[(r + j) % n_rows] at row r; wrapped rows only feed
    # time positions that are masked out before the max-pool.
    cols = [emb]
    for j in range(1, k_max):
        cols.append(pltpu.roll(emb, shift=n_rows - j, axis=0))
    windows = jnp.concatenate(cols, axis=1).astype(mm_dtype)  # (n_rows, k_max*Dp)

    conv = jnp.dot(windows, wc_ref[...],
                   preferred_element_type=jnp.float32)        # (n_rows, F3p) f32
    conv = jnp.maximum(conv + bc_ref[...], 0.0)               # bias + ReLU (f32)

    # ---- per-width validity mask (tiny broadcasts) + max-pool over time -----
    conv = conv.reshape(TB, S, F3p)
    t_idx = lax.broadcasted_iota(jnp.int32, (1, S, 1), 1)
    c_idx = lax.broadcasted_iota(jnp.int32, (1, 1, F3p), 2)
    valid = jnp.full((1, 1, F3p), S - filter_sizes[0] + 1, jnp.int32)
    for i in range(1, nb):
        valid = jnp.where(c_idx >= i * F,
                          jnp.int32(S - filter_sizes[i] + 1), valid)
    # ReLU output >= 0, so a 0-fill of invalid (wrapped) positions keeps the
    # max exact.
    pooled = jnp.max(jnp.where(t_idx < valid, conv, 0.0), axis=1)   # (TB, F3p)

    # ---- MLP head: (Linear -> LeakyReLU) x3 -> Linear ------------------------
    def leaky(v):
        return jnp.where(v > 0, v, 0.01 * v)   # nn.LeakyReLU(negative_slope=0.01)

    h = leaky(jnp.dot(pooled.astype(mm_dtype), w0_ref[...],
                      preferred_element_type=jnp.float32) + b0_ref[...])
    h = leaky(jnp.dot(h.astype(mm_dtype), w1_ref[...],
                      preferred_element_type=jnp.float32) + b1_ref[...])
    h = leaky(jnp.dot(h.astype(mm_dtype), w2_ref[...],
                      preferred_element_type=jnp.float32) + b2_ref[...])
    out_ref[...] = jnp.dot(h.astype(mm_dtype), w3_ref[...],
                           preferred_element_type=jnp.float32) + b3_ref[...]


# ----------------------------------------------------------------------------
# Wrapper: lane-dense padding, batch tiling, weight packing, pallas_call.
# ----------------------------------------------------------------------------
def textcnn_forward(tokens, emb_table, conv_params, mlp_params,
                    *, mm_dtype=jnp.bfloat16, target_rows=256):
    B, S = tokens.shape
    V, D = emb_table.shape
    filter_sizes = tuple(int(w.shape[0]) for (w, _) in conv_params)
    F = int(conv_params[0][0].shape[2])
    nb = len(conv_params)
    k_max = max(filter_sizes)
    assert S >= k_max, "sequence shorter than the largest filter width"

    Dp = _round_up(D, 128)                    # lane-padded embedding dim
    F3 = nb * F
    F3p = _round_up(F3, 128)                  # lane-padded fused conv width

    # Batch tile: aim for >= target_rows matmul rows per grid step (256 on
    # v6e/v7x; use target_rows=512 on v5e's 4x128^2 MXU).
    tb_target = max(1, target_rows // S)
    if B <= tb_target:
        TB = B
    else:
        TB = max(8, (tb_target // 8) * 8)     # keep output block sublane-tiled
    B_pad = _round_up(B, TB)
    grid = (B_pad // TB,)

    # Tokens -> flat i32 scalar-prefetch operand (padded batches use id 0).
    tok_flat = jnp.zeros((B_pad * S,), jnp.int32)
    tok_flat = tok_flat.at[: B * S].set(tokens.reshape(-1).astype(jnp.int32))

    # Embedding table: lane-padded, left in HBM, rows DMA-gathered in-kernel.
    table = jnp.zeros((V, Dp), jnp.float32).at[:, :D].set(
        emb_table.astype(jnp.float32))

    # Combined conv weight (k_max*Dp, F3p): tap j occupies rows
    # [j*Dp, j*Dp+D); bank i occupies columns [i*F, (i+1)*F); shorter widths /
    # padded lanes get zero taps (contribute nothing).
    wc = jnp.zeros((k_max * Dp, F3p), jnp.float32)
    bc = jnp.zeros((1, F3p), jnp.float32)
    for i, (w, b) in enumerate(conv_params):
        k_i = int(w.shape[0])
        for j in range(k_i):
            wc = wc.at[j * Dp: j * Dp + D, i * F:(i + 1) * F].set(w[j])
        bc = bc.at[:, i * F:(i + 1) * F].set(b.reshape(1, F))
    wc = wc.astype(mm_dtype)

    # MLP weights, zero-padded to 128-lane multiples; biases stay f32.
    (w0, b0), (w1, b1), (w2, b2), (w3, b3) = mlp_params
    C = int(w3.shape[1])
    H0p = _round_up(int(w0.shape[1]), 128)
    H1p = _round_up(int(w1.shape[1]), 128)
    H2p = _round_up(int(w2.shape[1]), 128)
    Cp = _round_up(C, 128)

    def pad_linear(w, b, din_p, dout_p):
        din, dout = int(w.shape[0]), int(w.shape[1])
        wp = jnp.zeros((din_p, dout_p), jnp.float32).at[:din, :dout].set(w)
        bp = jnp.zeros((1, dout_p), jnp.float32).at[:, :dout].set(
            b.reshape(1, dout))
        return wp.astype(mm_dtype), bp

    w0p, b0p = pad_linear(w0, b0, F3p, H0p)
    w1p, b1p = pad_linear(w1, b1, H0p, H1p)
    w2p, b2p = pad_linear(w2, b2, H1p, H2p)
    w3p, b3p = pad_linear(w3, b3, H2p, Cp)

    kernel = functools.partial(_textcnn_kernel, TB=TB, S=S, F=F,
                               filter_sizes=filter_sizes, mm_dtype=mm_dtype)

    def resident(arr):  # full-array block, constant index map -> stays in VMEM
        return pl.BlockSpec(arr.shape, lambda b, tok: (0, 0))

    grid_spec = pltpu.PrefetchScalarGridSpec(
        num_scalar_prefetch=1,
        grid=grid,
        in_specs=[
            pl.BlockSpec(memory_space=pl.ANY),     # embedding table in HBM
            resident(wc), resident(bc),
            resident(w0p), resident(b0p),
            resident(w1p), resident(b1p),
            resident(w2p), resident(b2p),
            resident(w3p), resident(b3p),
        ],
        out_specs=pl.BlockSpec((TB, Cp), lambda b, tok: (b, 0)),
        scratch_shapes=[
            pltpu.VMEM((TB * S, Dp), jnp.float32),     # gathered embeddings
            pltpu.SemaphoreType.DMA((TB * S,)),        # one sem per gather row
        ],
    )

    out = pl.pallas_call(
        kernel,
        out_shape=jax.ShapeDtypeStruct((B_pad, Cp), jnp.float32),
        grid_spec=grid_spec,
        compiler_params=pltpu.CompilerParams(
            dimension_semantics=("parallel",)),        # v7x: 2 TCs
    )(tok_flat, table, wc, bc, w0p, b0p, w1p, b1p, w2p, b2p, w3p, b3p)

    return out[:B, :C]


# ----------------------------------------------------------------------------
# Pure-JAX reference (unfused, PyTorch-equivalent).  With mm_dtype=bf16 it
# rounds the matmul operands exactly like the kernel does (f32 accumulation),
# so the comparison stays tight; with mm_dtype=f32 it is the exact module.
# ----------------------------------------------------------------------------
def textcnn_reference(tokens, emb_table, conv_params, mlp_params,
                      mm_dtype=jnp.float32):
    def q(x):
        return x.astype(mm_dtype).astype(jnp.float32)

    emb = q(jnp.take(emb_table.astype(jnp.float32), tokens, axis=0))  # (B,S,D)
    pooled = []
    for (w, b) in conv_params:
        k = int(w.shape[0])
        L = emb.shape[1] - k + 1
        acc = jnp.zeros((emb.shape[0], L, w.shape[2]), jnp.float32)
        wq = q(w)
        for j in range(k):
            acc = acc + jnp.einsum('bld,df->blf', emb[:, j:j + L, :], wq[j])
        acc = jnp.maximum(acc + b.reshape(1, 1, -1), 0.0)
        pooled.append(jnp.max(acc, axis=1))
    h = jnp.concatenate(pooled, axis=1)

    def leaky(v):
        return jnp.where(v > 0, v, 0.01 * v)

    (w0, b0), (w1, b1), (w2, b2), (w3, b3) = mlp_params
    h = leaky(q(h) @ q(w0) + b0)
    h = leaky(q(h) @ q(w1) + b1)
    h = leaky(q(h) @ q(w2) + b2)
    return q(h) @ q(w3) + b3


if __name__ == "__main__":
    # Small synthetic configuration consistent with the module.
    batch = 2
    seq_len = 16
    vocab_size = 100
    embed_dim = 32
    filter_num = 8
    filter_sizes = (3, 4, 5)
    class_num = 4
    feat_dim = len(filter_sizes) * filter_num  # 24

    key = jax.random.PRNGKey(0)
    keys = jax.random.split(key, 16)

    tokens = jax.random.randint(keys[0], (batch, seq_len), 0, vocab_size,
                                dtype=jnp.int32)
    emb_table = 0.1 * jax.random.normal(keys[1], (vocab_size, embed_dim),
                                        jnp.float32)

    # Conv params: PyTorch Conv2d weight (F, 1, k, D) stored here as (k, D, F);
    # bias stored as (1, F).
    conv_params = []
    for i, k_sz in enumerate(filter_sizes):
        w = 0.1 * jax.random.normal(keys[2 + 2 * i],
                                    (k_sz, embed_dim, filter_num), jnp.float32)
        b = 0.1 * jax.random.normal(keys[3 + 2 * i], (1, filter_num),
                                    jnp.float32)
        conv_params.append((w, b))

    # Linear params stored as (in, out) (== PyTorch W.T); bias (1, out).
    def linear_init(kw, kb, din, dout):
        w = 0.1 * jax.random.normal(kw, (din, dout), jnp.float32)
        b = 0.1 * jax.random.normal(kb, (1, dout), jnp.float32)
        return w, b

    mlp_params = (
        linear_init(keys[8], keys[9], feat_dim, feat_dim * 2),       # hiddens
        linear_init(keys[10], keys[11], feat_dim * 2, feat_dim),     # hiddens1
        linear_init(keys[12], keys[13], feat_dim, feat_dim // 2),    # hiddens2
        linear_init(keys[14], keys[15], feat_dim // 2, class_num),   # fc
    )

    logits = textcnn_forward(tokens, emb_table, conv_params, mlp_params,
                             mm_dtype=jnp.bfloat16)
    logits = jax.block_until_ready(logits)

    ref_bf16 = jax.block_until_ready(
        textcnn_reference(tokens, emb_table, conv_params, mlp_params,
                          mm_dtype=jnp.bfloat16))
    ref_f32 = jax.block_until_ready(
        textcnn_reference(tokens, emb_table, conv_params, mlp_params,
                          mm_dtype=jnp.float32))

    assert logits.shape == (batch, class_num)
    assert jnp.allclose(logits, ref_bf16, atol=5e-3, rtol=5e-3), \
        "mismatch vs bf16-operand reference"
    assert jnp.allclose(logits, ref_f32, atol=5e-2, rtol=5e-2), \
        "mismatch vs f32 reference"

    print("KERNEL_OK")
</pallas_src>

<mosaic_0001>
module attributes {stable_mosaic.version = 11 : i64} {
  func.func @_textcnn_kernel(%arg0: i32, %arg1: memref<32xi32, #tpu.memory_space<smem>>, %arg2: memref<100x128xf32, #tpu.memory_space<any>>, %arg3: memref<640x128xbf16, #tpu.memory_space<vmem>>, %arg4: memref<1x128xf32, #tpu.memory_space<vmem>>, %arg5: memref<128x128xbf16, #tpu.memory_space<vmem>>, %arg6: memref<1x128xf32, #tpu.memory_space<vmem>>, %arg7: memref<128x128xbf16, #tpu.memory_space<vmem>>, %arg8: memref<1x128xf32, #tpu.memory_space<vmem>>, %arg9: memref<128x128xbf16, #tpu.memory_space<vmem>>, %arg10: memref<1x128xf32, #tpu.memory_space<vmem>>, %arg11: memref<128x128xbf16, #tpu.memory_space<vmem>>, %arg12: memref<1x128xf32, #tpu.memory_space<vmem>>, %arg13: memref<2x128xf32, #tpu.memory_space<vmem>>, %arg14: memref<32x128xf32, #tpu.memory_space<vmem>>, %arg15: memref<32x!tpu.dma_semaphore, #tpu.memory_space<semaphore_mem>>) attributes {dimension_semantics = [#tpu.dimension_semantics<parallel>], iteration_bounds = array<i64: 1>, scalar_prefetch = 1 : i64, scratch_operands = 2 : i64, tpu.core_type = #tpu.core_type<tc>, window_params = [{}, {pipeline_mode = #tpu.pipeline_mode<synchronous>, transform_indices = @transform_1, window_bounds = array<i64: 640, 128>}, {pipeline_mode = #tpu.pipeline_mode<synchronous>, transform_indices = @transform_2, window_bounds = array<i64: 1, 128>}, {pipeline_mode = #tpu.pipeline_mode<synchronous>, transform_indices = @transform_3, window_bounds = array<i64: 128, 128>}, {pipeline_mode = #tpu.pipeline_mode<synchronous>, transform_indices = @transform_4, window_bounds = array<i64: 1, 128>}, {pipeline_mode = #tpu.pipeline_mode<synchronous>, transform_indices = @transform_5, window_bounds = array<i64: 128, 128>}, {pipeline_mode = #tpu.pipeline_mode<synchronous>, transform_indices = @transform_6, window_bounds = array<i64: 1, 128>}, {pipeline_mode = #tpu.pipeline_mode<synchronous>, transform_indices = @transform_7, window_bounds = array<i64: 128, 128>}, {pipeline_mode = #tpu.pipeline_mode<synchronous>, transform_indices = @transform_8, window_bounds = array<i64: 1, 128>}, {pipeline_mode = #tpu.pipeline_mode<synchronous>, transform_indices = @transform_9, window_bounds = array<i64: 128, 128>}, {pipeline_mode = #tpu.pipeline_mode<synchronous>, transform_indices = @transform_10, window_bounds = array<i64: 1, 128>}, {transform_indices = @transform_11, window_bounds = array<i64: 2, 128>}]} {
    %c32_i32 = arith.constant 32 : i32
    %0 = arith.muli %arg0, %c32_i32 : i32
    %c0_i32 = arith.constant 0 : i32
    %c32_i32_0 = arith.constant 32 : i32
    %1 = arith.addi %c0_i32, %c32_i32_0 : i32
    %c1_i32 = arith.constant 1 : i32
    scf.for %arg16 = %c0_i32 to %1 step %c1_i32  : i32 {
      %c1_i32_42 = arith.constant 1 : i32
      %77 = arith.muli %arg16, %c1_i32_42 : i32
      %c0_i32_43 = arith.constant 0 : i32
      %78 = arith.addi %c0_i32_43, %77 : i32
      %79 = arith.addi %0, %78 : i32
      %80 = arith.index_cast %79 : i32 to index
      %81 = memref.load %arg1[%80] : memref<32xi32, #tpu.memory_space<smem>>
      %c0_i32_44 = arith.constant 0 : i32
      %82 = arith.maxsi %81, %c0_i32_44 : i32
      %c99_i32 = arith.constant 99 : i32
      %83 = arith.minsi %82, %c99_i32 : i32
      %c0_i32_45 = arith.constant 0 : i32
      %84 = tpu.memref_slice %arg2[%83, %c0_i32_45] : memref<100x128xf32, #tpu.memory_space<any>> -> memref<1x128xf32, #tpu.memory_space<any>>
      %c0_i32_46 = arith.constant 0 : i32
      %85 = tpu.memref_slice %arg14[%78, %c0_i32_46] : memref<32x128xf32, #tpu.memory_space<vmem>> -> memref<1x128xf32, #tpu.memory_space<vmem>>
      %86 = tpu.memref_slice %arg15[%78] : memref<32x!tpu.dma_semaphore, #tpu.memory_space<semaphore_mem>> -> memref<1x!tpu.dma_semaphore, #tpu.memory_space<semaphore_mem>>
      %87 = tpu.memref_squeeze %86 : memref<1x!tpu.dma_semaphore, #tpu.memory_space<semaphore_mem>> -> memref<!tpu.dma_semaphore, #tpu.memory_space<semaphore_mem>>
      tpu.enqueue_dma source(%84 : memref<1x128xf32, #tpu.memory_space<any>>) target(%85 : memref<1x128xf32, #tpu.memory_space<vmem>>) target_semaphore(%87 : memref<!tpu.dma_semaphore, #tpu.memory_space<semaphore_mem>>)
    }
    %c32_i32_1 = arith.constant 32 : i32
    %c0_i32_2 = arith.constant 0 : i32
    %c32_i32_3 = arith.constant 32 : i32
    %2 = arith.addi %c0_i32_2, %c32_i32_3 : i32
    %c1_i32_4 = arith.constant 1 : i32
    scf.for %arg16 = %c0_i32_2 to %2 step %c1_i32_4  : i32 {
      %c1_i32_42 = arith.constant 1 : i32
      %77 = arith.muli %arg16, %c1_i32_42 : i32
      %c0_i32_43 = arith.constant 0 : i32
      %78 = arith.addi %c0_i32_43, %77 : i32
      %c0_i32_44 = arith.constant 0 : i32
      %c0_i32_45 = arith.constant 0 : i32
      %79 = tpu.memref_slice %arg2[%c0_i32_44, %c0_i32_45] : memref<100x128xf32, #tpu.memory_space<any>> -> memref<1x128xf32, #tpu.memory_space<any>>
      %c0_i32_46 = arith.constant 0 : i32
      %80 = tpu.memref_slice %arg14[%78, %c0_i32_46] : memref<32x128xf32, #tpu.memory_space<vmem>> -> memref<1x128xf32, #tpu.memory_space<vmem>>
      %81 = tpu.memref_slice %arg15[%78] : memref<32x!tpu.dma_semaphore, #tpu.memory_space<semaphore_mem>> -> memref<1x!tpu.dma_semaphore, #tpu.memory_space<semaphore_mem>>
      %82 = tpu.memref_squeeze %81 : memref<1x!tpu.dma_semaphore, #tpu.memory_space<semaphore_mem>> -> memref<!tpu.dma_semaphore, #tpu.memory_space<semaphore_mem>>
      tpu.wait_dma2 semaphore(%82 : memref<!tpu.dma_semaphore, #tpu.memory_space<semaphore_mem>>) src(%79 : memref<1x128xf32, #tpu.memory_space<any>>) dst(%80 : memref<1x128xf32, #tpu.memory_space<vmem>>)
    }
    %c32_i32_5 = arith.constant 32 : i32
    %c0 = arith.constant 0 : index
    %c0_6 = arith.constant 0 : index
    %3 = vector.load %arg14[%c0, %c0_6] : memref<32x128xf32, #tpu.memory_space<vmem>>, vector<32x128xf32>
    %c31_i32 = arith.constant 31 : i32
    %4 = tpu.dynamic_rotate %3 by %c31_i32 dim 0 : vector<32x128xf32>, i32 -> vector<32x128xf32>
    %c30_i32 = arith.constant 30 : i32
    %5 = tpu.dynamic_rotate %3 by %c30_i32 dim 0 : vector<32x128xf32>, i32 -> vector<32x128xf32>
    %c29_i32 = arith.constant 29 : i32
    %6 = tpu.dynamic_rotate %3 by %c29_i32 dim 0 : vector<32x128xf32>, i32 -> vector<32x128xf32>
    %c28_i32 = arith.constant 28 : i32
    %7 = tpu.dynamic_rotate %3 by %c28_i32 dim 0 : vector<32x128xf32>, i32 -> vector<32x128xf32>
    %8 = tpu.concatenate %3, %4, %5, %6, %7 in 1 : vector<32x128xf32>, vector<32x128xf32>, vector<32x128xf32>, vector<32x128xf32>, vector<32x128xf32> -> vector<32x640xf32>
    %9 = arith.truncf %8 : vector<32x640xf32> to vector<32x640xbf16>
    %c0_7 = arith.constant 0 : index
    %c0_8 = arith.constant 0 : index
    %10 = vector.load %arg3[%c0_7, %c0_8] : memref<640x128xbf16, #tpu.memory_space<vmem>>, vector<640x128xbf16>
    %cst = arith.constant dense<0.000000e+00> : vector<32x128xf32>
    %11 = tpu.matmul %9, %10, %cst {dimension_numbers = #tpu.dot_dimension_numbers<[1], [0], [0], [1], [0, 0, 1, 1], [], []>} : vector<32x640xbf16>, vector<640x128xbf16>, vector<32x128xf32> -> vector<32x128xf32>
    %c0_9 = arith.constant 0 : index
    %c0_10 = arith.constant 0 : index
    %12 = vector.load %arg4[%c0_9, %c0_10] : memref<1x128xf32, #tpu.memory_space<vmem>>, vector<1x128xf32>
    %13 = vector.broadcast %12 : vector<1x128xf32> to vector<32x128xf32>
    %14 = arith.addf %11, %13 : vector<32x128xf32>
    %cst_11 = arith.constant 0.000000e+00 : f32
    %15 = vector.broadcast %cst_11 : f32 to vector<32x128xf32>
    %16 = arith.maximumf %14, %15 : vector<32x128xf32>
    %17 = vector.shape_cast %16 : vector<32x128xf32> to vector<2x16x128xf32>
    %18 = tpu.iota {dimensions = array<i32: 1>} : vector<1x16x1xi32>
    %19 = tpu.iota {dimensions = array<i32: 2>} : vector<1x1x128xi32>
    %c14_i32 = arith.constant 14 : i32
    %20 = vector.broadcast %c14_i32 : i32 to vector<1x1x128xi32>
    %c8_i32 = arith.constant 8 : i32
    %21 = vector.broadcast %c8_i32 : i32 to vector<1x1x128xi32>
    %22 = arith.cmpi sge, %19, %21 : vector<1x1x128xi32>
    %c13_i32 = arith.constant 13 : i32
    %23 = vector.broadcast %c13_i32 : i32 to vector<1x1x128xi32>
    %24 = arith.select %22, %23, %20 : vector<1x1x128xi1>, vector<1x1x128xi32>
    %c16_i32 = arith.constant 16 : i32
    %25 = vector.broadcast %c16_i32 : i32 to vector<1x1x128xi32>
    %26 = arith.cmpi sge, %19, %25 : vector<1x1x128xi32>
    %c12_i32 = arith.constant 12 : i32
    %27 = vector.broadcast %c12_i32 : i32 to vector<1x1x128xi32>
    %28 = arith.select %26, %27, %24 : vector<1x1x128xi1>, vector<1x1x128xi32>
    %29 = vector.broadcast %18 : vector<1x16x1xi32> to vector<1x16x128xi32>
    %30 = vector.broadcast %28 : vector<1x1x128xi32> to vector<1x16x128xi32>
    %31 = arith.cmpi slt, %29, %30 : vector<1x16x128xi32>
    %cst_12 = arith.constant 0.000000e+00 : f32
    %32 = vector.shape_cast %31 : vector<1x16x128xi1> to vector<1x16x128xi1>
    %33 = vector.broadcast %32 : vector<1x16x128xi1> to vector<2x16x128xi1>
    %34 = vector.broadcast %cst_12 : f32 to vector<2x16x128xf32>
    %35 = arith.select %33, %17, %34 : vector<2x16x128xi1>, vector<2x16x128xf32>
    %cst_13 = arith.constant dense<0xFF800000> : vector<2x128xf32>
    %36 = vector.multi_reduction <maximumf>, %35, %cst_13 [1] : vector<2x16x128xf32> to vector<2x128xf32>
    %37 = arith.truncf %36 : vector<2x128xf32> to vector<2x128xbf16>
    %c0_14 = arith.constant 0 : index
    %c0_15 = arith.constant 0 : index
    %38 = vector.load %arg5[%c0_14, %c0_15] : memref<128x128xbf16, #tpu.memory_space<vmem>>, vector<128x128xbf16>
    %cst_16 = arith.constant dense<0.000000e+00> : vector<2x128xf32>
    %39 = tpu.matmul %37, %38, %cst_16 {dimension_numbers = #tpu.dot_dimension_numbers<[1], [0], [0], [1], [0, 0, 1, 1], [], []>} : vector<2x128xbf16>, vector<128x128xbf16>, vector<2x128xf32> -> vector<2x128xf32>
    %c0_17 = arith.constant 0 : index
    %c0_18 = arith.constant 0 : index
    %40 = vector.load %arg6[%c0_17, %c0_18] : memref<1x128xf32, #tpu.memory_space<vmem>>, vector<1x128xf32>
    %41 = vector.broadcast %40 : vector<1x128xf32> to vector<2x128xf32>
    %42 = arith.addf %39, %41 : vector<2x128xf32>
    %cst_19 = arith.constant 0.000000e+00 : f32
    %43 = vector.broadcast %cst_19 : f32 to vector<2x128xf32>
    %44 = arith.cmpf ogt, %42, %43 : vector<2x128xf32>
    %cst_20 = arith.constant 0.00999999977 : f32
    %45 = vector.broadcast %cst_20 : f32 to vector<2x128xf32>
    %46 = arith.mulf %45, %42 : vector<2x128xf32>
    %47 = arith.select %44, %42, %46 : vector<2x128xi1>, vector<2x128xf32>
    %48 = arith.truncf %47 : vector<2x128xf32> to vector<2x128xbf16>
    %c0_21 = arith.constant 0 : index
    %c0_22 = arith.constant 0 : index
    %49 = vector.load %arg7[%c0_21, %c0_22] : memref<128x128xbf16, #tpu.memory_space<vmem>>, vector<128x128xbf16>
    %cst_23 = arith.constant dense<0.000000e+00> : vector<2x128xf32>
    %50 = tpu.matmul %48, %49, %cst_23 {dimension_numbers = #tpu.dot_dimension_numbers<[1], [0], [0], [1], [0, 0, 1, 1], [], []>} : vector<2x128xbf16>, vector<128x128xbf16>, vector<2x128xf32> -> vector<2x128xf32>
    %c0_24 = arith.constant 0 : index
    %c0_25 = arith.constant 0 : index
    %51 = vector.load %arg8[%c0_24, %c0_25] : memref<1x128xf32, #tpu.memory_space<vmem>>, vector<1x128xf32>
    %52 = vector.broadcast %51 : vector<1x128xf32> to vector<2x128xf32>
    %53 = arith.addf %50, %52 : vector<2x128xf32>
    %cst_26 = arith.constant 0.000000e+00 : f32
    %54 = vector.broadcast %cst_26 : f32 to vector<2x128xf32>
    %55 = arith.cmpf ogt, %53, %54 : vector<2x128xf32>
    %cst_27 = arith.constant 0.00999999977 : f32
    %56 = vector.broadcast %cst_27 : f32 to vector<2x128xf32>
    %57 = arith.mulf %56, %53 : vector<2x128xf32>
    %58 = arith.select %55, %53, %57 : vector<2x128xi1>, vector<2x128xf32>
    %59 = arith.truncf %58 : vector<2x128xf32> to vector<2x128xbf16>
    %c0_28 = arith.constant 0 : index
    %c0_29 = arith.constant 0 : index
    %60 = vector.load %arg9[%c0_28, %c0_29] : memref<128x128xbf16, #tpu.memory_space<vmem>>, vector<128x128xbf16>
    %cst_30 = arith.constant dense<0.000000e+00> : vector<2x128xf32>
    %61 = tpu.matmul %59, %60, %cst_30 {dimension_numbers = #tpu.dot_dimension_numbers<[1], [0], [0], [1], [0, 0, 1, 1], [], []>} : vector<2x128xbf16>, vector<128x128xbf16>, vector<2x128xf32> -> vector<2x128xf32>
    %c0_31 = arith.constant 0 : index
    %c0_32 = arith.constant 0 : index
    %62 = vector.load %arg10[%c0_31, %c0_32] : memref<1x128xf32, #tpu.memory_space<vmem>>, vector<1x128xf32>
    %63 = vector.broadcast %62 : vector<1x128xf32> to vector<2x128xf32>
    %64 = arith.addf %61, %63 : vector<2x128xf32>
    %cst_33 = arith.constant 0.000000e+00 : f32
    %65 = vector.broadcast %cst_33 : f32 to vector<2x128xf32>
    %66 = arith.cmpf ogt, %64, %65 : vector<2x128xf32>
    %cst_34 = arith.constant 0.00999999977 : f32
    %67 = vector.broadcast %cst_34 : f32 to vector<2x128xf32>
    %68 = arith.mulf %67, %64 : vector<2x128xf32>
    %69 = arith.select %66, %64, %68 : vector<2x128xi1>, vector<2x128xf32>
    %70 = arith.truncf %69 : vector<2x128xf32> to vector<2x128xbf16>
    %c0_35 = arith.constant 0 : index
    %c0_36 = arith.constant 0 : index
    %71 = vector.load %arg11[%c0_35, %c0_36] : memref<128x128xbf16, #tpu.memory_space<vmem>>, vector<128x128xbf16>
    %cst_37 = arith.constant dense<0.000000e+00> : vector<2x128xf32>
    %72 = tpu.matmul %70, %71, %cst_37 {dimension_numbers = #tpu.dot_dimension_numbers<[1], [0], [0], [1], [0, 0, 1, 1], [], []>} : vector<2x128xbf16>, vector<128x128xbf16>, vector<2x128xf32> -> vector<2x128xf32>
    %c0_38 = arith.constant 0 : index
    %c0_39 = arith.constant 0 : index
    %73 = vector.load %arg12[%c0_38, %c0_39] : memref<1x128xf32, #tpu.memory_space<vmem>>, vector<1x128xf32>
    %74 = vector.broadcast %73 : vector<1x128xf32> to vector<2x128xf32>
    %75 = arith.addf %72, %74 : vector<2x128xf32>
    %c0_40 = arith.constant 0 : index
    %c0_41 = arith.constant 0 : index
    %76 = vector.load %arg13[%c0_40, %c0_41] : memref<2x128xf32, #tpu.memory_space<vmem>>, vector<2x128xf32>
    tpu.vector_store %arg13[%c0_40, %c0_41], %75 {strides = array<i32>} : memref<2x128xf32, #tpu.memory_space<vmem>>, vector<2x128xf32>,
    return
  }
  func.func @transform_1(%arg0: i32, %arg1: memref<32xi32, #tpu.memory_space<smem>>) -> (i32, i32) {
    %c0_i32 = arith.constant 0 : i32
    %c0_i32_0 = arith.constant 0 : i32
    %c0_i32_1 = arith.constant 0 : i32
    return %c0_i32, %c0_i32_0 : i32, i32
  }
  func.func @transform_2(%arg0: i32, %arg1: memref<32xi32, #tpu.memory_space<smem>>) -> (i32, i32) {
    %c0_i32 = arith.constant 0 : i32
    %c0_i32_0 = arith.constant 0 : i32
    %c0_i32_1 = arith.constant 0 : i32
    return %c0_i32, %c0_i32_0 : i32, i32
  }
  func.func @transform_3(%arg0: i32, %arg1: memref<32xi32, #tpu.memory_space<smem>>) -> (i32, i32) {
    %c0_i32 = arith.constant 0 : i32
    %c0_i32_0 = arith.constant 0 : i32
    %c0_i32_1 = arith.constant 0 : i32
    return %c0_i32, %c0_i32_0 : i32, i32
  }
  func.func @transform_4(%arg0: i32, %arg1: memref<32xi32, #tpu.memory_space<smem>>) -> (i32, i32) {
    %c0_i32 = arith.constant 0 : i32
    %c0_i32_0 = arith.constant 0 : i32
    %c0_i32_1 = arith.constant 0 : i32
    return %c0_i32, %c0_i32_0 : i32, i32
  }
  func.func @transform_5(%arg0: i32, %arg1: memref<32xi32, #tpu.memory_space<smem>>) -> (i32, i32) {
    %c0_i32 = arith.constant 0 : i32
    %c0_i32_0 = arith.constant 0 : i32
    %c0_i32_1 = arith.constant 0 : i32
    return %c0_i32, %c0_i32_0 : i32, i32
  }
  func.func @transform_6(%arg0: i32, %arg1: memref<32xi32, #tpu.memory_space<smem>>) -> (i32, i32) {
    %c0_i32 = arith.constant 0 : i32
    %c0_i32_0 = arith.constant 0 : i32
    %c0_i32_1 = arith.constant 0 : i32
    return %c0_i32, %c0_i32_0 : i32, i32
  }
  func.func @transform_7(%arg0: i32, %arg1: memref<32xi32, #tpu.memory_space<smem>>) -> (i32, i32) {
    %c0_i32 = arith.constant 0 : i32
    %c0_i32_0 = arith.constant 0 : i32
    %c0_i32_1 = arith.constant 0 : i32
    return %c0_i32, %c0_i32_0 : i32, i32
  }
  func.func @transform_8(%arg0: i32, %arg1: memref<32xi32, #tpu.memory_space<smem>>) -> (i32, i32) {
    %c0_i32 = arith.constant 0 : i32
    %c0_i32_0 = arith.constant 0 : i32
    %c0_i32_1 = arith.constant 0 : i32
    return %c0_i32, %c0_i32_0 : i32, i32
  }
  func.func @transform_9(%arg0: i32, %arg1: memref<32xi32, #tpu.memory_space<smem>>) -> (i32, i32) {
    %c0_i32 = arith.constant 0 : i32
    %c0_i32_0 = arith.constant 0 : i32
    %c0_i32_1 = arith.constant 0 : i32
    return %c0_i32, %c0_i32_0 : i32, i32
  }
  func.func @transform_10(%arg0: i32, %arg1: memref<32xi32, #tpu.memory_space<smem>>) -> (i32, i32) {
    %c0_i32 = arith.constant 0 : i32
    %c0_i32_0 = arith.constant 0 : i32
    %c0_i32_1 = arith.constant 0 : i32
    return %c0_i32, %c0_i32_0 : i32, i32
  }
  func.func @transform_11(%arg0: i32, %arg1: memref<32xi32, #tpu.memory_space<smem>>) -> (i32, i32) {
    %c0_i32 = arith.constant 0 : i32
    %c0_i32_0 = arith.constant 0 : i32
    return %arg0, %c0_i32 : i32, i32
  }
}

</mosaic_0001>

<llo_original>
// kernel: tpu_custom_call.1
$region0: #{tpu_custom_call.1}
  #allocation0 [shape = 'u32[]', space=smem, size = 0x4, offset = 0x4, fixed_abs, tag = 'smem constant byte address 0x4 - core index']
  #allocation1 [shape = 'u32[144,128]{1,0:T(1,128)}', space=vmem, size = 0x12000, scoped, tag = 'internal scratch']
  #allocation2 [shape = 'f32[32,128]{1,0:T(8,128)}', space=vmem, size = 0x4000, scoped, tag = 'scratch operand']
  #allocation3 [shape = 's32[32]{0}', space=sflag, size = 0x80, scoped, tag = 'scratch operand']
  #allocation4 [shape = 's32[1]{0}', space=sflag, size = 0x4, scoped, tag = 'scoped memory for tpu_custom_call.1']
  #allocation5 [shape = 'u8[512]{0}', space=smem, size = 0x200, scoped, tag = 'prefetched SMEM operand 0']
  #allocation16 [shape = 's32[]', space=sflag, size = 0x4, offset = 0, fixed_abs, tag = 'sflag constant byte address 0x0 - dummy sync flag']
  #allocation17 [shape = 's32[]', space=sflag, size = 0x4, offset = 0, fixed_abs, tag = 'sflag constant byte address 0x0 - dummy sync flag']
  #allocation18 [shape = 'u32[]', space=smem, size = 0x4, offset = 0x44, fixed_abs, tag = 'smem constant byte address 0x44 - assertion arg 0']
  #allocation19 [shape = 'u32[]', space=smem, size = 0x4, offset = 0x48, fixed_abs, tag = 'smem constant byte address 0x48 - assertion arg 1']
  %s0 = inlined_call_operand.hbm [shape: s32[32], index: 0, kind: input, shape index: {}]
  %s1 = inlined_call_operand.hbm [shape: f32[100,128], index: 1, kind: input, shape index: {}]
  %s2 = inlined_call_operand.hbm [shape: bf16[640,128], index: 2, kind: input, shape index: {}]
  %s3 = inlined_call_operand.vmem [shape: f32[1,128], index: 3, kind: input, shape index: {}]
  %s4 = inlined_call_operand.hbm [shape: bf16[128,128], index: 4, kind: input, shape index: {}]
  %s5 = inlined_call_operand.vmem [shape: f32[1,128], index: 5, kind: input, shape index: {}]
  %s6 = inlined_call_operand.hbm [shape: bf16[128,128], index: 6, kind: input, shape index: {}]
  %s7 = inlined_call_operand.vmem [shape: f32[1,128], index: 7, kind: input, shape index: {}]
  %s8 = inlined_call_operand.hbm [shape: bf16[128,128], index: 8, kind: input, shape index: {}]
  %s9 = inlined_call_operand.vmem [shape: f32[1,128], index: 9, kind: input, shape index: {}]
  %s10 = inlined_call_operand.hbm [shape: bf16[128,128], index: 10, kind: input, shape index: {}]
  %s11 = inlined_call_operand.vmem [shape: f32[1,128], index: 11, kind: input, shape index: {}]
  %s12 = inlined_call_operand.hbm [shape: f32[2,128], index: 12, kind: output, shape index: {}]
  %s13 = sld [smem:[#allocation0]]
  $region88: #{tpu_custom_call.1} parent=0
    _
  %s15 = ssub.s32 1, %s13
  %s16 = scalar_select 0, %s15, %s13
  %18 = dma.hbm_to_smem %s0, 16, [#allocation5], [#allocation4]
  %19 = dma.done [#allocation4], 16
  %20 = sfence
  $region1: #{tpu_custom_call.1} parent=0
    #allocation6 [shape = 'u8[163840]{0}', space=vmem, size = 0x28000, scoped, tag = 'input window, operand 2, single buffered']
    #allocation7 [shape = 's32[1]{0}', space=sflag, size = 0x4, scoped, tag = 'scoped memory for tpu_custom_call.1']
    #allocation8 [shape = 's32[1]{0}', space=sflag, size = 0x4, scoped, tag = 'scoped memory for tpu_custom_call.1']
    #allocation9 [shape = 'u8[32768]{0}', space=vmem, size = 0x8000, scoped, tag = 'input window, operand 4, single buffered']
    #allocation10 [shape = 's32[1]{0}', space=sflag, size = 0x4, scoped, tag = 'scoped memory for tpu_custom_call.1']
    #allocation11 [shape = 'u8[32768]{0}', space=vmem, size = 0x8000, scoped, tag = 'input window, operand 6, single buffered']
    #allocation12 [shape = 'u8[32768]{0}', space=vmem, size = 0x8000, scoped, tag = 'input window, operand 8, single buffered']
    #allocation13 [shape = 's32[1]{0}', space=sflag, size = 0x4, scoped, tag = 'scoped memory for tpu_custom_call.1']
    #allocation14 [shape = 'u8[32768]{0}', space=vmem, size = 0x8000, scoped, tag = 'input window, operand 10, single buffered']
    #allocation15 [shape = 'u8[1024]{0}', space=vmem, size = 0x400, scoped, tag = 'output window, operand 0, single buffered']
    %21 = vsyncpa [#allocation7], 0
    %22 = vsyncpa [#allocation10], 0
    %23 = vsyncpa [#allocation13], 0
    %24 = vsyncpa [#allocation8], 0
    // Predicated region
    $region2: #{tpu_custom_call.1} parent=1 // pred_check
      _
    $region3: #{tpu_custom_call.1} parent=1 // pred_check_branch
      %26 = sbr.rel (0) target = $region5
    $region4: #{tpu_custom_call.1} parent=1 // pred_region
      %s28 = ssub.s32 5120, 5120
      %29 = vsyncadd [#allocation7], %s28
      %s30 = sshll.u32 [#allocation6], 4
      %s31 = int_to_ptr.vmem [resolvable:$true] %s30
      %36 = dma.hbm_to_vmem [thread:$0]  %s2, 5120, %s31, [#allocation7], 64, 64, 4
    $region5: #{tpu_custom_call.1} parent=1 // pred_fallthru
      _
    // Predicated region
    $region6: #{tpu_custom_call.1} parent=1 // pred_check
      _
    $region7: #{tpu_custom_call.1} parent=1 // pred_check_branch
      %38 = sbr.rel (0) target = $region9
    $region8: #{tpu_custom_call.1} parent=1 // pred_region
      _
    $region9: #{tpu_custom_call.1} parent=1 // pred_fallthru
      _
    // Predicated region
    $region10: #{tpu_custom_call.1} parent=1 // pred_check
      _
    $region11: #{tpu_custom_call.1} parent=1 // pred_check_branch
      %40 = sbr.rel (0) target = $region13
    $region12: #{tpu_custom_call.1} parent=1 // pred_region
      %s42 = ssub.s32 1024, 1024
      %43 = vsyncadd [#allocation10], %s42
      %s44 = sshll.u32 [#allocation9], 4
      %s45 = int_to_ptr.vmem [resolvable:$true] %s44
      %50 = dma.hbm_to_vmem [thread:$0]  %s4, 1024, %s45, [#allocation10], 64, 64, 4
    $region13: #{tpu_custom_call.1} parent=1 // pred_fallthru
      _
    // Predicated region
    $region14: #{tpu_custom_call.1} parent=1 // pred_check
      _
    $region15: #{tpu_custom_call.1} parent=1 // pred_check_branch
      %52 = sbr.rel (0) target = $region17
    $region16: #{tpu_custom_call.1} parent=1 // pred_region
      _
    $region17: #{tpu_custom_call.1} parent=1 // pred_fallthru
      _
    // Predicated region
    $region18: #{tpu_custom_call.1} parent=1 // pred_check
      _
    $region19: #{tpu_custom_call.1} parent=1 // pred_check_branch
      %54 = sbr.rel (0) target = $region21
    $region20: #{tpu_custom_call.1} parent=1 // pred_region
      %s56 = ssub.s32 1024, 1024
      %57 = vsyncadd [#allocation10], %s56
      %s58 = sshll.u32 [#allocation11], 4
      %s59 = int_to_ptr.vmem [resolvable:$true] %s58
      %64 = dma.hbm_to_vmem [thread:$0]  %s6, 1024, %s59, [#allocation10], 64, 64, 4
    $region21: #{tpu_custom_call.1} parent=1 // pred_fallthru
      _
    // Predicated region
    $region22: #{tpu_custom_call.1} parent=1 // pred_check
      _
    $region23: #{tpu_custom_call.1} parent=1 // pred_check_branch
      %66 = sbr.rel (0) target = $region25
    $region24: #{tpu_custom_call.1} parent=1 // pred_region
      _
    $region25: #{tpu_custom_call.1} parent=1 // pred_fallthru
      _
    // Predicated region
    $region26: #{tpu_custom_call.1} parent=1 // pred_check
      _
    $region27: #{tpu_custom_call.1} parent=1 // pred_check_branch
      %68 = sbr.rel (0) target = $region29
    $region28: #{tpu_custom_call.1} parent=1 // pred_region
      %s70 = ssub.s32 1024, 1024
      %71 = vsyncadd [#allocation13], %s70
      %s72 = sshll.u32 [#allocation12], 4
      %s73 = int_to_ptr.vmem [resolvable:$true] %s72
      %78 = dma.hbm_to_vmem [thread:$0]  %s8, 1024, %s73, [#allocation13], 64, 64, 4
    $region29: #{tpu_custom_call.1} parent=1 // pred_fallthru
      _
    // Predicated region
    $region30: #{tpu_custom_call.1} parent=1 // pred_check
      _
    $region31: #{tpu_custom_call.1} parent=1 // pred_check_branch
      %80 = sbr.rel (0) target = $region33
    $region32: #{tpu_custom_call.1} parent=1 // pred_region
      _
    $region33: #{tpu_custom_call.1} parent=1 // pred_fallthru
      _
    // Predicated region
    $region34: #{tpu_custom_call.1} parent=1 // pred_check
      _
    $region35: #{tpu_custom_call.1} parent=1 // pred_check_branch
      %82 = sbr.rel (0) target = $region37
    $region36: #{tpu_custom_call.1} parent=1 // pred_region
      %s84 = ssub.s32 1024, 1024
      %85 = vsyncadd [#allocation13], %s84
      %s86 = sshll.u32 [#allocation14], 4
      %s87 = int_to_ptr.vmem [resolvable:$true] %s86
      %92 = dma.hbm_to_vmem [thread:$0]  %s10, 1024, %s87, [#allocation13], 64, 64, 4
    $region37: #{tpu_custom_call.1} parent=1 // pred_fallthru
      _
    // Predicated region
    $region38: #{tpu_custom_call.1} parent=1 // pred_check
      _
    $region39: #{tpu_custom_call.1} parent=1 // pred_check_branch
      %94 = sbr.rel (0) target = $region41
    $region40: #{tpu_custom_call.1} parent=1 // pred_region
      _
    $region41: #{tpu_custom_call.1} parent=1 // pred_fallthru
      _
    // Predicated region
    $region42: #{tpu_custom_call.1} parent=1 // pred_check
      _
    $region43: #{tpu_custom_call.1} parent=1 // pred_check_branch
      %96 = sbr.rel (0) target = $region45
    $region44: #{tpu_custom_call.1} parent=1 // pred_region
      %97 = dma.done [#allocation7], 5120
    $region45: #{tpu_custom_call.1} parent=1 // pred_fallthru
      _
    // Predicated region
    $region46: #{tpu_custom_call.1} parent=1 // pred_check
      _
    $region47: #{tpu_custom_call.1} parent=1 // pred_check_branch
      %99 = sbr.rel (0) target = $region49
    $region48: #{tpu_custom_call.1} parent=1 // pred_region
      %100 = dma.done [#allocation10], 1024
    $region49: #{tpu_custom_call.1} parent=1 // pred_fallthru
      _
    // Predicated region
    $region50: #{tpu_custom_call.1} parent=1 // pred_check
      _
    $region51: #{tpu_custom_call.1} parent=1 // pred_check_branch
      %102 = sbr.rel (0) target = $region53
    $region52: #{tpu_custom_call.1} parent=1 // pred_region
      %103 = dma.done [#allocation10], 1024
    $region53: #{tpu_custom_call.1} parent=1 // pred_fallthru
      _
    // Predicated region
    $region54: #{tpu_custom_call.1} parent=1 // pred_check
      _
    $region55: #{tpu_custom_call.1} parent=1 // pred_check_branch
      %105 = sbr.rel (0) target = $region57
    $region56: #{tpu_custom_call.1} parent=1 // pred_region
      %106 = dma.done [#allocation13], 1024
    $region57: #{tpu_custom_call.1} parent=1 // pred_fallthru
      _
    // Predicated region
    $region58: #{tpu_custom_call.1} parent=1 // pred_check
      _
    $region59: #{tpu_custom_call.1} parent=1 // pred_check_branch
      %108 = sbr.rel (0) target = $region61
    $region60: #{tpu_custom_call.1} parent=1 // pred_region
      %109 = dma.done [#allocation13], 1024
    $region61: #{tpu_custom_call.1} parent=1 // pred_fallthru
      _
    %s111 = smul.u32 0, 32
    loop: start=0, step=1, limit=32
    $region62: #{tpu_custom_call.1} parent=1 // loop_pre_header
      _
    $region63: #{tpu_custom_call.1} parent=1 // loop_header
      %s113 = sphi 0, %s117
      %p114 = scmp.ge.s32.totalorder %s113, 32
    $region64: #{tpu_custom_call.1} parent=1 // loop_header_branch
      %116 = sbr.rel (%p114) target = $region68
    $region65: #{tpu_custom_call.1} parent=1 // loop_body
      %s118 = sadd.s32 %s111, %s113
      %s119 = sld [smem:[#allocation5 + %s118]]
      %p120 = scmp.gt.s32.totalorder %s119, 0
      %s121 = scalar_select %p120, %s119, 0
      %p122 = scmp.lt.s32.totalorder %s121, 99
      %s123 = scalar_select %p122, %s121, 99
      %s124 = smul.addr %s123, 16
      %s125 = scalar_lea.hbm %s1, %s124
      %s126 = scalar_lea.vmem [#allocation2], %s113
      %s127 = scalar_lea.sflag [#allocation3], %s113
      // Predicated region
      $region69: #{tpu_custom_call.1} parent=65 // pred_check
        _
      $region70: #{tpu_custom_call.1} parent=65 // pred_check_branch
        %129 = sbr.rel target = $region72
      $region71: #{tpu_custom_call.1} parent=65 // pred_region
        %130 = sst [smem:[#allocation18]] [#allocation17]
        %131 = sst [smem:[#allocation19]] [#allocation16]
      $region72: #{tpu_custom_call.1} parent=65 // pred_fallthru
        _
      %133 = shalt.err (0)
      %s135 = sshll.u32 %s126, 4
      %s136 = int_to_ptr.vmem [resolvable:$true] %s135
      %138 = dma.hbm_to_vmem [thread:$0]  %s125, 16, %s136, %s127
    $region66: #{tpu_custom_call.1} parent=1 // loop_footer
      %s117 = sadd.s32 1, %s113
    $region67: #{tpu_custom_call.1} parent=1 // loop_footer_branch
      %112 = sbr.rel target = $region63
    $region68: #{tpu_custom_call.1} parent=1 // loop_exit
      _
    loop: start=0, step=1, limit=32
    $region73: #{tpu_custom_call.1} parent=1 // loop_pre_header
      _
    $region74: #{tpu_custom_call.1} parent=1 // loop_header
      %s140 = sphi 0, %s144
      %p141 = scmp.ge.s32.totalorder %s140, 32
    $region75: #{tpu_custom_call.1} parent=1 // loop_header_branch
      %143 = sbr.rel (%p141) target = $region79
    $region76: #{tpu_custom_call.1} parent=1 // loop_body
      %s145 = scalar_lea.sflag [#allocation3], %s140
      %s146 = smul.u32 1, 1
      %s147 = sshll.u32 %s146, 4
      %148 = dma.done %s145, %s147
    $region77: #{tpu_custom_call.1} parent=1 // loop_footer
      %s144 = sadd.s32 1, %s140
    $region78: #{tpu_custom_call.1} parent=1 // loop_footer_branch
      %139 = sbr.rel target = $region74
    $region79: #{tpu_custom_call.1} parent=1 // loop_exit
      _
    %v149 = vld [vmem:[#allocation2] sm:$0xff]
    %v150 = vld [vmem:[#allocation2 + $0x8] sm:$0xff]
    %v151 = vld [vmem:[#allocation2 + $0x10] sm:$0xff]
    %v152 = vld [vmem:[#allocation2 + $0x18] sm:$0xff]
    %v153 = vrot.slane %v149, 1
    %v154 = vrot.slane %v150, 1
    %v155 = vrot.slane %v151, 1
    %v156 = vrot.slane %v152, 1
    %v157 = vlaneseq
    %v158 = vshrl.u32 %v157, 7
    %vm159 = vcmp.lt.s32.totalorder %v158, 7
    %v160 = vsel %vm159, %v155, %v156
    %v161 = vsel %vm159, %v154, %v155
    %v162 = vsel %vm159, %v153, %v154
    %v163 = vsel %vm159, %v156, %v153
    %v164 = vrot.slane %v149, 2
    %v165 = vrot.slane %v150, 2
    %v166 = vrot.slane %v151, 2
    %v167 = vrot.slane %v152, 2
    %vm168 = vcmp.lt.s32.totalorder %v158, 6
    %v169 = vsel %vm168, %v166, %v167
    %v170 = vsel %vm168, %v165, %v166
    %v171 = vsel %vm168, %v164, %v165
    %v172 = vsel %vm168, %v167, %v164
    %v173 = vrot.slane %v149, 3
    %v174 = vrot.slane %v150, 3
    %v175 = vrot.slane %v151, 3
    %v176 = vrot.slane %v152, 3
    %vm177 = vcmp.lt.s32.totalorder %v158, 5
    %v178 = vsel %vm177, %v175, %v176
    %v179 = vsel %vm177, %v174, %v175
    %v180 = vsel %vm177, %v173, %v174
    %v181 = vsel %vm177, %v176, %v173
    %v182 = vrot.slane %v149, 4
    %v183 = vrot.slane %v150, 4
    %v184 = vrot.slane %v151, 4
    %v185 = vrot.slane %v152, 4
    %vm186 = vcmp.lt.s32.totalorder %v158, 4
    %v187 = vsel %vm186, %v184, %v185
    %v188 = vsel %vm186, %v183, %v184
    %v189 = vsel %vm186, %v182, %v183
    %v190 = vsel %vm186, %v185, %v182
    %v191 = vpack.c.bf16 %v150, %v149
    %v192 = vpack.c.bf16 %v161, %v162
    %v193 = vpack.c.bf16 %v170, %v171
    %v194 = vpack.c.bf16 %v179, %v180
    %v195 = vpack.c.bf16 %v188, %v189
    %v196 = vpack.c.bf16 %v152, %v151
    %v197 = vpack.c.bf16 %v163, %v160
    %v198 = vpack.c.bf16 %v172, %v169
    %v199 = vpack.c.bf16 %v181, %v178
    %v200 = vpack.c.bf16 %v190, %v187
    %v201 = vld [vmem:[#allocation6] sm:$0xf]
    %v202 = vld [vmem:[#allocation6 + $0x4] sm:$0xf]
    %v203 = vld [vmem:[#allocation6 + $0x8] sm:$0xf]
    %v204 = vld [vmem:[#allocation6 + $0xc] sm:$0xf]
    %v205 = vld [vmem:[#allocation6 + $0x10] sm:$0xf]
    %v206 = vld [vmem:[#allocation6 + $0x14] sm:$0xf]
    %v207 = vld [vmem:[#allocation6 + $0x18] sm:$0xf]
    %v208 = vld [vmem:[#allocation6 + $0x1c] sm:$0xf]
    %v209 = vld [vmem:[#allocation6 + $0x20] sm:$0xf]
    %v210 = vld [vmem:[#allocation6 + $0x24] sm:$0xf]
    %v211 = vld [vmem:[#allocation6 + $0x28] sm:$0xf]
    %v212 = vld [vmem:[#allocation6 + $0x2c] sm:$0xf]
    %v213 = vld [vmem:[#allocation6 + $0x30] sm:$0xf]
    %v214 = vld [vmem:[#allocation6 + $0x34] sm:$0xf]
    %v215 = vld [vmem:[#allocation6 + $0x38] sm:$0xf]
    %v216 = vld [vmem:[#allocation6 + $0x3c] sm:$0xf]
    %v217 = vld [vmem:[#allocation6 + $0x40] sm:$0xf]
    %v218 = vld [vmem:[#allocation6 + $0x44] sm:$0xf]
    %v219 = vld [vmem:[#allocation6 + $0x48] sm:$0xf]
    %v220 = vld [vmem:[#allocation6 + $0x4c] sm:$0xf]
    %v221 = vld [vmem:[#allocation6 + $0x50] sm:$0xf]
    %v222 = vld [vmem:[#allocation6 + $0x54] sm:$0xf]
    %v223 = vld [vmem:[#allocation6 + $0x58] sm:$0xf]
    %v224 = vld [vmem:[#allocation6 + $0x5c] sm:$0xf]
    %v225 = vld [vmem:[#allocation6 + $0x60] sm:$0xf]
    %v226 = vld [vmem:[#allocation6 + $0x64] sm:$0xf]
    %v227 = vld [vmem:[#allocation6 + $0x68] sm:$0xf]
    %v228 = vld [vmem:[#allocation6 + $0x6c] sm:$0xf]
    %v229 = vld [vmem:[#allocation6 + $0x70] sm:$0xf]
    %v230 = vld [vmem:[#allocation6 + $0x74] sm:$0xf]
    %v231 = vld [vmem:[#allocation6 + $0x78] sm:$0xf]
    %v232 = vld [vmem:[#allocation6 + $0x7c] sm:$0xf]
    %v233 = vld [vmem:[#allocation6 + $0x80] sm:$0xf]
    %v234 = vld [vmem:[#allocation6 + $0x84] sm:$0xf]
    %v235 = vld [vmem:[#allocation6 + $0x88] sm:$0xf]
    %v236 = vld [vmem:[#allocation6 + $0x8c] sm:$0xf]
    %v237 = vld [vmem:[#allocation6 + $0x90] sm:$0xf]
    %v238 = vld [vmem:[#allocation6 + $0x94] sm:$0xf]
    %v239 = vld [vmem:[#allocation6 + $0x98] sm:$0xf]
    %v240 = vld [vmem:[#allocation6 + $0x9c] sm:$0xf]
    %v241 = vld [vmem:[#allocation6 + $0xa0] sm:$0xf]
    %v242 = vld [vmem:[#allocation6 + $0xa4] sm:$0xf]
    %v243 = vld [vmem:[#allocation6 + $0xa8] sm:$0xf]
    %v244 = vld [vmem:[#allocation6 + $0xac] sm:$0xf]
    %v245 = vld [vmem:[#allocation6 + $0xb0] sm:$0xf]
    %v246 = vld [vmem:[#allocation6 + $0xb4] sm:$0xf]
    %v247 = vld [vmem:[#allocation6 + $0xb8] sm:$0xf]
    %v248 = vld [vmem:[#allocation6 + $0xbc] sm:$0xf]
    %v249 = vld [vmem:[#allocation6 + $0xc0] sm:$0xf]
    %v250 = vld [vmem:[#allocation6 + $0xc4] sm:$0xf]
    %v251 = vld [vmem:[#allocation6 + $0xc8] sm:$0xf]
    %v252 = vld [vmem:[#allocation6 + $0xcc] sm:$0xf]
    %v253 = vld [vmem:[#allocation6 + $0xd0] sm:$0xf]
    %v254 = vld [vmem:[#allocation6 + $0xd4] sm:$0xf]
    %v255 = vld [vmem:[#allocation6 + $0xd8] sm:$0xf]
    %v256 = vld [vmem:[#allocation6 + $0xdc] sm:$0xf]
    %v257 = vld [vmem:[#allocation6 + $0xe0] sm:$0xf]
    %v258 = vld [vmem:[#allocation6 + $0xe4] sm:$0xf]
    %v259 = vld [vmem:[#allocation6 + $0xe8] sm:$0xf]
    %v260 = vld [vmem:[#allocation6 + $0xec] sm:$0xf]
    %v261 = vld [vmem:[#allocation6 + $0xf0] sm:$0xf]
    %v262 = vld [vmem:[#allocation6 + $0xf4] sm:$0xf]
    %v263 = vld [vmem:[#allocation6 + $0xf8] sm:$0xf]
    %v264 = vld [vmem:[#allocation6 + $0xfc] sm:$0xf]
    %v265 = vld [vmem:[#allocation6 + $0x100] sm:$0xf]
    %v266 = vld [vmem:[#allocation6 + $0x104] sm:$0xf]
    %v267 = vld [vmem:[#allocation6 + $0x108] sm:$0xf]
    %v268 = vld [vmem:[#allocation6 + $0x10c] sm:$0xf]
    %v269 = vld [vmem:[#allocation6 + $0x110] sm:$0xf]
    %v270 = vld [vmem:[#allocation6 + $0x114] sm:$0xf]
    %v271 = vld [vmem:[#allocation6 + $0x118] sm:$0xf]
    %v272 = vld [vmem:[#allocation6 + $0x11c] sm:$0xf]
    %v273 = vld [vmem:[#allocation6 + $0x120] sm:$0xf]
    %v274 = vld [vmem:[#allocation6 + $0x124] sm:$0xf]
    %v275 = vld [vmem:[#allocation6 + $0x128] sm:$0xf]
    %v276 = vld [vmem:[#allocation6 + $0x12c] sm:$0xf]
    %v277 = vld [vmem:[#allocation6 + $0x130] sm:$0xf]
    %v278 = vld [vmem:[#allocation6 + $0x134] sm:$0xf]
    %v279 = vld [vmem:[#allocation6 + $0x138] sm:$0xf]
    %v280 = vld [vmem:[#allocation6 + $0x13c] sm:$0xf]
    %v281 = vld [vmem:[%s3] sm:$0x1]
    %v283 = vlaneseq
    %v284 = vshrl.u32 %v283, 7
    %v285 = vsub.s32 0, %v284
    %v286 = vrot.slane %v281, %v285
    %v368 = vunpack.c.l.b16 %v201
    %v369 = vunpack.c.l.b16 %v202
    %v370 = vunpack.c.l.b16 %v203
    %v371 = vunpack.c.l.b16 %v204
    %v372 = vunpack.c.l.b16 %v205
    %v373 = vunpack.c.l.b16 %v206
    %v374 = vunpack.c.l.b16 %v207
    %v375 = vunpack.c.l.b16 %v208
    %v376 = vunpack.c.l.b16 %v209
    %v377 = vunpack.c.l.b16 %v210
    %v378 = vunpack.c.l.b16 %v211
    %v379 = vunpack.c.l.b16 %v212
    %v380 = vunpack.c.l.b16 %v213
    %v381 = vunpack.c.l.b16 %v214
    %v382 = vunpack.c.l.b16 %v215
    %v383 = vunpack.c.l.b16 %v216
    %v384 = vunpack.c.l.b16 %v217
    %v385 = vunpack.c.l.b16 %v218
    %v386 = vunpack.c.l.b16 %v219
    %v387 = vunpack.c.l.b16 %v220
    %v388 = vunpack.c.l.b16 %v221
    %v389 = vunpack.c.l.b16 %v222
    %v390 = vunpack.c.l.b16 %v223
    %v391 = vunpack.c.l.b16 %v224
    %v392 = vunpack.c.l.b16 %v225
    %v393 = vunpack.c.l.b16 %v226
    %v394 = vunpack.c.l.b16 %v227
    %v395 = vunpack.c.l.b16 %v228
    %v396 = vunpack.c.l.b16 %v229
    %v397 = vunpack.c.l.b16 %v230
    %v398 = vunpack.c.l.b16 %v231
    %v399 = vunpack.c.l.b16 %v232
    %v400 = vunpack.c.l.b16 %v233
    %v401 = vunpack.c.l.b16 %v234
    %v402 = vunpack.c.l.b16 %v235
    %v403 = vunpack.c.l.b16 %v236
    %v404 = vunpack.c.l.b16 %v237
    %v405 = vunpack.c.l.b16 %v238
    %v406 = vunpack.c.l.b16 %v239
    %v407 = vunpack.c.l.b16 %v240
    %v408 = vunpack.c.l.b16 %v241
    %v409 = vunpack.c.l.b16 %v242
    %v410 = vunpack.c.l.b16 %v243
    %v411 = vunpack.c.l.b16 %v244
    %v412 = vunpack.c.l.b16 %v245
    %v413 = vunpack.c.l.b16 %v246
    %v414 = vunpack.c.l.b16 %v247
    %v415 = vunpack.c.l.b16 %v248
    %v416 = vunpack.c.l.b16 %v249
    %v417 = vunpack.c.l.b16 %v250
    %v418 = vunpack.c.l.b16 %v251
    %v419 = vunpack.c.l.b16 %v252
    %v420 = vunpack.c.l.b16 %v253
    %v421 = vunpack.c.l.b16 %v254
    %v422 = vunpack.c.l.b16 %v255
    %v423 = vunpack.c.l.b16 %v256
    %v424 = vunpack.c.l.b16 %v257
    %v425 = vunpack.c.l.b16 %v258
    %v426 = vunpack.c.l.b16 %v259
    %v427 = vunpack.c.l.b16 %v260
    %v428 = vunpack.c.l.b16 %v261
    %v429 = vunpack.c.l.b16 %v262
    %v430 = vunpack.c.l.b16 %v263
    %v431 = vunpack.c.l.b16 %v264
    %v432 = vunpack.c.l.b16 %v265
    %v433 = vunpack.c.l.b16 %v266
    %v434 = vunpack.c.l.b16 %v267
    %v435 = vunpack.c.l.b16 %v268
    %v436 = vunpack.c.l.b16 %v269
    %v437 = vunpack.c.l.b16 %v270
    %v438 = vunpack.c.l.b16 %v271
    %v439 = vunpack.c.l.b16 %v272
    %v440 = vunpack.c.l.b16 %v273
    %v441 = vunpack.c.l.b16 %v274
    %v442 = vunpack.c.l.b16 %v275
    %v443 = vunpack.c.l.b16 %v276
    %v444 = vunpack.c.l.b16 %v277
    %v445 = vunpack.c.l.b16 %v278
    %v446 = vunpack.c.l.b16 %v279
    %v447 = vunpack.c.l.b16 %v280
    %v448 = vpack.c.b16 %v369, %v368
    %v449 = vpack.c.b16 %v371, %v370
    %v450 = vpack.c.b16 %v373, %v372
    %v451 = vpack.c.b16 %v375, %v374
    %v452 = vpack.c.b16 %v377, %v376
    %v453 = vpack.c.b16 %v379, %v378
    %v454 = vpack.c.b16 %v381, %v380
    %v455 = vpack.c.b16 %v383, %v382
    %v456 = vpack.c.b16 %v385, %v384
    %v457 = vpack.c.b16 %v387, %v386
    %v458 = vpack.c.b16 %v389, %v388
    %v459 = vpack.c.b16 %v391, %v390
    %v460 = vpack.c.b16 %v393, %v392
    %v461 = vpack.c.b16 %v395, %v394
    %v462 = vpack.c.b16 %v397, %v396
    %v463 = vpack.c.b16 %v399, %v398
    %v464 = vpack.c.b16 %v401, %v400
    %v465 = vpack.c.b16 %v403, %v402
    %v466 = vpack.c.b16 %v405, %v404
    %v467 = vpack.c.b16 %v407, %v406
    %v468 = vpack.c.b16 %v409, %v408
    %v469 = vpack.c.b16 %v411, %v410
    %v470 = vpack.c.b16 %v413, %v412
    %v471 = vpack.c.b16 %v415, %v414
    %v472 = vpack.c.b16 %v417, %v416
    %v473 = vpack.c.b16 %v419, %v418
    %v474 = vpack.c.b16 %v421, %v420
    %v475 = vpack.c.b16 %v423, %v422
    %v476 = vpack.c.b16 %v425, %v424
    %v477 = vpack.c.b16 %v427, %v426
    %v478 = vpack.c.b16 %v429, %v428
    %v479 = vpack.c.b16 %v431, %v430
    %v480 = vpack.c.b16 %v433, %v432
    %v481 = vpack.c.b16 %v435, %v434
    %v482 = vpack.c.b16 %v437, %v436
    %v483 = vpack.c.b16 %v439, %v438
    %v484 = vpack.c.b16 %v441, %v440
    %v485 = vpack.c.b16 %v443, %v442
    %v486 = vpack.c.b16 %v445, %v444
    %v487 = vpack.c.b16 %v447, %v446
    %528 = vmatprep.subr.bf16.mxu0 0
    %529 = vmatpush1.bf16.msra.mxu0 %v448
    %530 = vmatprep.subr.bf16.mxu0 0
    %531 = vmatpush1.bf16.msra.mxu0 %v449
    %532 = vmatprep.subr.bf16.mxu0 0
    %533 = vmatpush1.bf16.msra.mxu0 %v450
    %534 = vmatprep.subr.bf16.mxu0 0
    %535 = vmatpush1.bf16.msra.mxu0 %v451
    %536 = vmatprep.subr.bf16.mxu0 0
    %537 = vmatpush1.bf16.msra.mxu0 %v452
    %538 = vmatprep.subr.bf16.mxu0 0
    %539 = vmatpush1.bf16.msra.mxu0 %v453
    %540 = vmatprep.subr.bf16.mxu0 0
    %541 = vmatpush1.bf16.msra.mxu0 %v454
    %542 = vmatprep.subr.bf16.mxu0 0
    %543 = vmatpush1.bf16.msra.mxu0 %v455
    %544 = vmatprep.subr.bf16.mxu0 0
    %545 = vmatpush1.bf16.msra.mxu0 %v456
    %546 = vmatprep.subr.bf16.mxu0 0
    %547 = vmatpush1.bf16.msra.mxu0 %v457
    %548 = vmatprep.subr.bf16.mxu0 0
    %549 = vmatpush1.bf16.msra.mxu0 %v458
    %550 = vmatprep.subr.bf16.mxu0 0
    %551 = vmatpush1.bf16.msra.mxu0 %v459
    %552 = vmatprep.subr.bf16.mxu0 0
    %553 = vmatpush1.bf16.msra.mxu0 %v460
    %554 = vmatprep.subr.bf16.mxu0 0
    %555 = vmatpush1.bf16.msra.mxu0 %v461
    %556 = vmatprep.subr.bf16.mxu0 0
    %557 = vmatpush1.bf16.msra.mxu0 %v462
    %558 = vmatprep.subr.bf16.mxu0 0
    %559 = vmatpush1.bf16.msra.mxu0 %v463
    %560 = vmatprep.mubr.bf16.mxu0 %v192
    %561 = vmatmul.mubr.bf16.gmra.mrb[0].mxu0 %v191
    %v562 = vpop.f32.mrb[0].mxu0
    %v563 = vadd.f32 %v286, %v562
    %v564 = vpop.f32.mrb[0].mxu0
    %v565 = vpop.f32.mrb[0].mxu0
    %v566 = vadd.f32 %v286, %v565
    %v567 = vpop.f32.mrb[0].mxu0
    %568 = vmatprep.mubr.bf16.mxu0 %v197
    %569 = vmatmul.mubr.bf16.gmra.mrb[0].mxu0 %v196
    %v570 = vpop.f32.mrb[0].mxu0
    %v571 = vadd.f32 %v286, %v570
    %v572 = vpop.f32.mrb[0].mxu0
    %v573 = vpop.f32.mrb[0].mxu0
    %v574 = vadd.f32 %v286, %v573
    %v575 = vpop.f32.mrb[0].mxu0
    %576 = vdwg.mxu0
    %577 = vmatprep.subr.bf16.mxu0 0
    %578 = vmatpush1.bf16.msra.mxu0 %v464
    %579 = vmatprep.subr.bf16.mxu0 0
    %580 = vmatpush1.bf16.msra.mxu0 %v465
    %581 = vmatprep.subr.bf16.mxu0 0
    %582 = vmatpush1.bf16.msra.mxu0 %v466
    %583 = vmatprep.subr.bf16.mxu0 0
    %584 = vmatpush1.bf16.msra.mxu0 %v467
    %585 = vmatprep.subr.bf16.mxu0 0
    %586 = vmatpush1.bf16.msra.mxu0 %v468
    %587 = vmatprep.subr.bf16.mxu0 0
    %588 = vmatpush1.bf16.msra.mxu0 %v469
    %589 = vmatprep.subr.bf16.mxu0 0
    %590 = vmatpush1.bf16.msra.mxu0 %v470
    %591 = vmatprep.subr.bf16.mxu0 0
    %592 = vmatpush1.bf16.msra.mxu0 %v471
    %593 = vmatprep.subr.bf16.mxu0 0
    %594 = vmatpush1.bf16.msra.mxu0 %v472
    %595 = vmatprep.subr.bf16.mxu0 0
    %596 = vmatpush1.bf16.msra.mxu0 %v473
    %597 = vmatprep.subr.bf16.mxu0 0
    %598 = vmatpush1.bf16.msra.mxu0 %v474
    %599 = vmatprep.subr.bf16.mxu0 0
    %600 = vmatpush1.bf16.msra.mxu0 %v475
    %601 = vmatprep.subr.bf16.mxu0 0
    %602 = vmatpush1.bf16.msra.mxu0 %v476
    %603 = vmatprep.subr.bf16.mxu0 0
    %604 = vmatpush1.bf16.msra.mxu0 %v477
    %605 = vmatprep.subr.bf16.mxu0 0
    %606 = vmatpush1.bf16.msra.mxu0 %v478
    %607 = vmatprep.subr.bf16.mxu0 0
    %608 = vmatpush1.bf16.msra.mxu0 %v479
    %609 = vmatprep.mubr.bf16.mxu0 %v194
    %610 = vmatmul.mubr.bf16.gmra.mrb[0].mxu0 %v193
    %v611 = vpop.f32.mrb[0].mxu0
    %v612 = vadd.f32 %v563, %v611
    %v613 = vpop.f32.mrb[0].mxu0
    %v614 = vpop.f32.mrb[0].mxu0
    %v615 = vadd.f32 %v566, %v614
    %v616 = vpop.f32.mrb[0].mxu0
    %617 = vmatprep.mubr.bf16.mxu0 %v199
    %618 = vmatmul.mubr.bf16.gmra.mrb[0].mxu0 %v198
    %v619 = vpop.f32.mrb[0].mxu0
    %v620 = vadd.f32 %v571, %v619
    %v621 = vpop.f32.mrb[0].mxu0
    %v622 = vpop.f32.mrb[0].mxu0
    %v623 = vadd.f32 %v574, %v622
    %v624 = vpop.f32.mrb[0].mxu0
    %625 = vdwg.mxu0
    %626 = vmatprep.subr.bf16.mxu0 0
    %627 = vmatpush1.bf16.msra.mxu0 %v480
    %628 = vmatprep.subr.bf16.mxu0 0
    %629 = vmatpush1.bf16.msra.mxu0 %v481
    %630 = vmatprep.subr.bf16.mxu0 0
    %631 = vmatpush1.bf16.msra.mxu0 %v482
    %632 = vmatprep.subr.bf16.mxu0 0
    %633 = vmatpush1.bf16.msra.mxu0 %v483
    %634 = vmatprep.subr.bf16.mxu0 0
    %635 = vmatpush1.bf16.msra.mxu0 %v484
    %636 = vmatprep.subr.bf16.mxu0 0
    %637 = vmatpush1.bf16.msra.mxu0 %v485
    %638 = vmatprep.subr.bf16.mxu0 0
    %639 = vmatpush1.bf16.msra.mxu0 %v486
    %640 = vmatprep.subr.bf16.mxu0 0
    %641 = vmatpush1.bf16.msra.mxu0 %v487
    %642 = vmatprep.subr.bf16.mxu0 0
    %643 = vmatpush1.bf16.msra.mxu0 0
    %644 = vmatprep.subr.bf16.mxu0 0
    %645 = vmatpush1.bf16.msra.mxu0 0
    %646 = vmatprep.subr.bf16.mxu0 0
    %647 = vmatpush1.bf16.msra.mxu0 0
    %648 = vmatprep.subr.bf16.mxu0 0
    %649 = vmatpush1.bf16.msra.mxu0 0
    %650 = vmatprep.subr.bf16.mxu0 0
    %651 = vmatpush1.bf16.msra.mxu0 0
    %652 = vmatprep.subr.bf16.mxu0 0
    %653 = vmatpush1.bf16.msra.mxu0 0
    %654 = vmatprep.subr.bf16.mxu0 0
    %655 = vmatpush1.bf16.msra.mxu0 0
    %656 = vmatprep.subr.bf16.mxu0 0
    %657 = vmatpush1.bf16.msra.mxu0 0
    %658 = vmatprep.mubr.bf16.mxu0 0
    %659 = vmatmul.mubr.bf16.gmra.mrb[0].mxu0 %v195
    %v660 = vpop.f32.mrb[0].mxu0
    %v661 = vadd.f32 %v612, %v660
    %v662 = vpop.f32.mrb[0].mxu0
    %v663 = vpop.f32.mrb[0].mxu0
    %v664 = vadd.f32 %v615, %v663
    %v665 = vpop.f32.mrb[0].mxu0
    %666 = vmatprep.mubr.bf16.mxu0 0
    %667 = vmatmul.mubr.bf16.gmra.mrb[0].mxu0 %v200
    %v668 = vpop.f32.mrb[0].mxu0
    %v669 = vadd.f32 %v620, %v668
    %v670 = vpop.f32.mrb[0].mxu0
    %v671 = vpop.f32.mrb[0].mxu0
    %v672 = vadd.f32 %v623, %v671
    %v673 = vpop.f32.mrb[0].mxu0
    %674 = vdwg.mxu0
    %v675 = vmax.f32 %v661, 0.0
    %v676 = vmax.f32 %v664, 0.0
    %v677 = vmax.f32 %v669, 0.0
    %v678 = vmax.f32 %v672, 0.0
    %v679 = vadd.s32 %v158, 8
    %v680 = vlaneseq
    %v681 = vand.u32 %v680, 127
    %vm682 = vcmp.ge.s32.totalorder %v681, 8
    %v683 = vsel %vm682, 13, 14
    %vm684 = vcmp.ge.s32.totalorder %v681, 16
    %v685 = vsel %vm684, 12, %v683
    %vm686 = vcmp.lt.s32.totalorder %v158, %v685
    %vm687 = vcmp.lt.s32.totalorder %v679, %v685
    %v688 = vsel %vm686, 1, 0
    %v689 = vsel %vm687, 1, 0
    %vm690 = vcmp.eq.s32.totalorder %v688, 1
    %vm691 = vcmp.eq.s32.totalorder %v689, 1
    %v692 = vsel %vm690, %v675, 0.0
    %v693 = vsel %vm691, %v676, 0.0
    %v694 = vsel %vm690, %v677, 0.0
    %v695 = vsel %vm691, %v678, 0.0
    %v696 = vmax.f32 %v692, %v693
    %v697 = vrot.slane %v696, 4
    %v698 = vmax.f32 %v696, %v697
    %v699 = vrot.slane %v698, 2
    %v700 = vmax.f32 %v698, %v699
    %v701 = vrot.slane %v700, 1
    %v702 = vmax.f32 %v700, %v701
    %v703 = vmax.f32 %v694, %v695
    %v704 = vrot.slane %v703, 4
    %v705 = vmax.f32 %v703, %v704
    %v706 = vrot.slane %v705, 2
    %v707 = vmax.f32 %v705, %v706
    %v708 = vrot.slane %v707, 1
    %v709 = vmax.f32 %v707, %v708
    %v710 = vpack.c.bf16 %v702, %v702
    %v711 = vpack.c.bf16 %v709, %v709
    %v712 = vld [vmem:[#allocation9] sm:$0xf]
    %v713 = vld [vmem:[#allocation9 + $0x4] sm:$0xf]
    %v714 = vld [vmem:[#allocation9 + $0x8] sm:$0xf]
    %v715 = vld [vmem:[#allocation9 + $0xc] sm:$0xf]
    %v716 = vld [vmem:[#allocation9 + $0x10] sm:$0xf]
    %v717 = vld [vmem:[#allocation9 + $0x14] sm:$0xf]
    %v718 = vld [vmem:[#allocation9 + $0x18] sm:$0xf]
    %v719 = vld [vmem:[#allocation9 + $0x1c] sm:$0xf]
    %v720 = vld [vmem:[#allocation9 + $0x20] sm:$0xf]
    %v721 = vld [vmem:[#allocation9 + $0x24] sm:$0xf]
    %v722 = vld [vmem:[#allocation9 + $0x28] sm:$0xf]
    %v723 = vld [vmem:[#allocation9 + $0x2c] sm:$0xf]
    %v724 = vld [vmem:[#allocation9 + $0x30] sm:$0xf]
    %v725 = vld [vmem:[#allocation9 + $0x34] sm:$0xf]
    %v726 = vld [vmem:[#allocation9 + $0x38] sm:$0xf]
    %v727 = vld [vmem:[#allocation9 + $0x3c] sm:$0xf]
    %v728 = vld [vmem:[%s5] sm:$0x1]
    %v730 = vlaneseq
    %v731 = vshrl.u32 %v730, 7
    %v732 = vsub.s32 0, %v731
    %v733 = vrot.slane %v728, %v732
    %v737 = vunpack.c.l.b16 %v710
    %v738 = vunpack.c.l.b16 %v711
    %vm739 = vcmask 1041409
    %v740 = vsel %vm739, %v738, %v737
    %v741 = vpack.c.b16 %v740, %v740
    %v759 = vunpack.c.l.b16 %v712
    %v760 = vunpack.c.l.b16 %v713
    %v761 = vunpack.c.l.b16 %v714
    %v762 = vunpack.c.l.b16 %v715
    %v763 = vunpack.c.l.b16 %v716
    %v764 = vunpack.c.l.b16 %v717
    %v765 = vunpack.c.l.b16 %v718
    %v766 = vunpack.c.l.b16 %v719
    %v767 = vunpack.c.l.b16 %v720
    %v768 = vunpack.c.l.b16 %v721
    %v769 = vunpack.c.l.b16 %v722
    %v770 = vunpack.c.l.b16 %v723
    %v771 = vunpack.c.l.b16 %v724
    %v772 = vunpack.c.l.b16 %v725
    %v773 = vunpack.c.l.b16 %v726
    %v774 = vunpack.c.l.b16 %v727
    %v775 = vpack.c.b16 %v760, %v759
    %v776 = vpack.c.b16 %v762, %v761
    %v777 = vpack.c.b16 %v764, %v763
    %v778 = vpack.c.b16 %v766, %v765
    %v779 = vpack.c.b16 %v768, %v767
    %v780 = vpack.c.b16 %v770, %v769
    %v781 = vpack.c.b16 %v772, %v771
    %v782 = vpack.c.b16 %v774, %v773
    %791 = vmatprep.subr.bf16.mxu0 0
    %792 = vmatpush1.bf16.msra.mxu0 %v775
    %793 = vmatprep.subr.bf16.mxu0 0
    %794 = vmatpush1.bf16.msra.mxu0 %v776
    %795 = vmatprep.subr.bf16.mxu0 0
    %796 = vmatpush1.bf16.msra.mxu0 %v777
    %797 = vmatprep.subr.bf16.mxu0 0
    %798 = vmatpush1.bf16.msra.mxu0 %v778
    %799 = vmatprep.subr.bf16.mxu0 0
    %800 = vmatpush1.bf16.msra.mxu0 %v779
    %801 = vmatprep.subr.bf16.mxu0 0
    %802 = vmatpush1.bf16.msra.mxu0 %v780
    %803 = vmatprep.subr.bf16.mxu0 0
    %804 = vmatpush1.bf16.msra.mxu0 %v781
    %805 = vmatprep.subr.bf16.mxu0 0
    %806 = vmatpush1.bf16.msra.mxu0 %v782
    %807 = vmatprep.subr.bf16.mxu0 0
    %808 = vmatpush1.bf16.msra.mxu0 0
    %809 = vmatprep.subr.bf16.mxu0 0
    %810 = vmatpush1.bf16.msra.mxu0 0
    %811 = vmatprep.subr.bf16.mxu0 0
    %812 = vmatpush1.bf16.msra.mxu0 0
    %813 = vmatprep.subr.bf16.mxu0 0
    %814 = vmatpush1.bf16.msra.mxu0 0
    %815 = vmatprep.subr.bf16.mxu0 0
    %816 = vmatpush1.bf16.msra.mxu0 0
    %817 = vmatprep.subr.bf16.mxu0 0
    %818 = vmatpush1.bf16.msra.mxu0 0
    %819 = vmatprep.subr.bf16.mxu0 0
    %820 = vmatpush1.bf16.msra.mxu0 0
    %821 = vmatprep.subr.bf16.mxu0 0
    %822 = vmatpush1.bf16.msra.mxu0 0
    %823 = vmatprep.mubr.bf16.mxu0 0
    %824 = vmatmul.mubr.bf16.gmra.mrb[0].mxu0 %v741
    %v825 = vpop.f32.mrb[0].mxu0
    %v826 = vadd.f32 %v733, %v825
    %v827 = vpop.f32.mrb[0].mxu0
    %v828 = vpop.f32.mrb[0].mxu0
    %v829 = vpop.f32.mrb[0].mxu0
    %830 = vdwg.mxu0
    %vm831 = vcmp.gt.f32.partialorder %v826, 0.0
    %v832 = vmul.f32 %v826, 0.01
    %v833 = vsel %vm831, %v826, %v832
    %v834 = vpack.c.bf16 %v833, %v833
    %v835 = vld [vmem:[#allocation11] sm:$0xf]
    %v836 = vld [vmem:[#allocation11 + $0x4] sm:$0xf]
    %v837 = vld [vmem:[#allocation11 + $0x8] sm:$0xf]
    %v838 = vld [vmem:[#allocation11 + $0xc] sm:$0xf]
    %v839 = vld [vmem:[#allocation11 + $0x10] sm:$0xf]
    %v840 = vld [vmem:[#allocation11 + $0x14] sm:$0xf]
    %v841 = vld [vmem:[#allocation11 + $0x18] sm:$0xf]
    %v842 = vld [vmem:[#allocation11 + $0x1c] sm:$0xf]
    %v843 = vld [vmem:[#allocation11 + $0x20] sm:$0xf]
    %v844 = vld [vmem:[#allocation11 + $0x24] sm:$0xf]
    %v845 = vld [vmem:[#allocation11 + $0x28] sm:$0xf]
    %v846 = vld [vmem:[#allocation11 + $0x2c] sm:$0xf]
    %v847 = vld [vmem:[#allocation11 + $0x30] sm:$0xf]
    %v848 = vld [vmem:[#allocation11 + $0x34] sm:$0xf]
    %v849 = vld [vmem:[#allocation11 + $0x38] sm:$0xf]
    %v850 = vld [vmem:[#allocation11 + $0x3c] sm:$0xf]
    %v851 = vld [vmem:[%s7] sm:$0x1]
    %v853 = vlaneseq
    %v854 = vshrl.u32 %v853, 7
    %v855 = vsub.s32 0, %v854
    %v856 = vrot.slane %v851, %v855
    %v874 = vunpack.c.l.b16 %v835
    %v875 = vunpack.c.l.b16 %v836
    %v876 = vunpack.c.l.b16 %v837
    %v877 = vunpack.c.l.b16 %v838
    %v878 = vunpack.c.l.b16 %v839
    %v879 = vunpack.c.l.b16 %v840
    %v880 = vunpack.c.l.b16 %v841
    %v881 = vunpack.c.l.b16 %v842
    %v882 = vunpack.c.l.b16 %v843
    %v883 = vunpack.c.l.b16 %v844
    %v884 = vunpack.c.l.b16 %v845
    %v885 = vunpack.c.l.b16 %v846
    %v886 = vunpack.c.l.b16 %v847
    %v887 = vunpack.c.l.b16 %v848
    %v888 = vunpack.c.l.b16 %v849
    %v889 = vunpack.c.l.b16 %v850
    %v890 = vpack.c.b16 %v875, %v874
    %v891 = vpack.c.b16 %v877, %v876
    %v892 = vpack.c.b16 %v879, %v878
    %v893 = vpack.c.b16 %v881, %v880
    %v894 = vpack.c.b16 %v883, %v882
    %v895 = vpack.c.b16 %v885, %v884
    %v896 = vpack.c.b16 %v887, %v886
    %v897 = vpack.c.b16 %v889, %v888
    %906 = vmatprep.subr.bf16.mxu0 0
    %907 = vmatpush1.bf16.msra.mxu0 %v890
    %908 = vmatprep.subr.bf16.mxu0 0
    %909 = vmatpush1.bf16.msra.mxu0 %v891
    %910 = vmatprep.subr.bf16.mxu0 0
    %911 = vmatpush1.bf16.msra.mxu0 %v892
    %912 = vmatprep.subr.bf16.mxu0 0
    %913 = vmatpush1.bf16.msra.mxu0 %v893
    %914 = vmatprep.subr.bf16.mxu0 0
    %915 = vmatpush1.bf16.msra.mxu0 %v894
    %916 = vmatprep.subr.bf16.mxu0 0
    %917 = vmatpush1.bf16.msra.mxu0 %v895
    %918 = vmatprep.subr.bf16.mxu0 0
    %919 = vmatpush1.bf16.msra.mxu0 %v896
    %920 = vmatprep.subr.bf16.mxu0 0
    %921 = vmatpush1.bf16.msra.mxu0 %v897
    %922 = vmatprep.subr.bf16.mxu0 0
    %923 = vmatpush1.bf16.msra.mxu0 0
    %924 = vmatprep.subr.bf16.mxu0 0
    %925 = vmatpush1.bf16.msra.mxu0 0
    %926 = vmatprep.subr.bf16.mxu0 0
    %927 = vmatpush1.bf16.msra.mxu0 0
    %928 = vmatprep.subr.bf16.mxu0 0
    %929 = vmatpush1.bf16.msra.mxu0 0
    %930 = vmatprep.subr.bf16.mxu0 0
    %931 = vmatpush1.bf16.msra.mxu0 0
    %932 = vmatprep.subr.bf16.mxu0 0
    %933 = vmatpush1.bf16.msra.mxu0 0
    %934 = vmatprep.subr.bf16.mxu0 0
    %935 = vmatpush1.bf16.msra.mxu0 0
    %936 = vmatprep.subr.bf16.mxu0 0
    %937 = vmatpush1.bf16.msra.mxu0 0
    %938 = vmatprep.mubr.bf16.mxu0 0
    %939 = vmatmul.mubr.bf16.gmra.mrb[0].mxu0 %v834
    %v940 = vpop.f32.mrb[0].mxu0
    %v941 = vadd.f32 %v856, %v940
    %v942 = vpop.f32.mrb[0].mxu0
    %v943 = vpop.f32.mrb[0].mxu0
    %v944 = vpop.f32.mrb[0].mxu0
    %945 = vdwg.mxu0
    %vm946 = vcmp.gt.f32.partialorder %v941, 0.0
    %v947 = vmul.f32 %v941, 0.01
    %v948 = vsel %vm946, %v941, %v947
    %v949 = vpack.c.bf16 %v948, %v948
    %v950 = vld [vmem:[#allocation12] sm:$0xf]
    %v951 = vld [vmem:[#allocation12 + $0x4] sm:$0xf]
    %v952 = vld [vmem:[#allocation12 + $0x8] sm:$0xf]
    %v953 = vld [vmem:[#allocation12 + $0xc] sm:$0xf]
    %v954 = vld [vmem:[#allocation12 + $0x10] sm:$0xf]
    %v955 = vld [vmem:[#allocation12 + $0x14] sm:$0xf]
    %v956 = vld [vmem:[#allocation12 + $0x18] sm:$0xf]
    %v957 = vld [vmem:[#allocation12 + $0x1c] sm:$0xf]
    %v958 = vld [vmem:[#allocation12 + $0x20] sm:$0xf]
    %v959 = vld [vmem:[#allocation12 + $0x24] sm:$0xf]
    %v960 = vld [vmem:[#allocation12 + $0x28] sm:$0xf]
    %v961 = vld [vmem:[#allocation12 + $0x2c] sm:$0xf]
    %v962 = vld [vmem:[#allocation12 + $0x30] sm:$0xf]
    %v963 = vld [vmem:[#allocation12 + $0x34] sm:$0xf]
    %v964 = vld [vmem:[#allocation12 + $0x38] sm:$0xf]
    %v965 = vld [vmem:[#allocation12 + $0x3c] sm:$0xf]
    %v966 = vld [vmem:[%s9] sm:$0x1]
    %v968 = vlaneseq
    %v969 = vshrl.u32 %v968, 7
    %v970 = vsub.s32 0, %v969
    %v971 = vrot.slane %v966, %v970
    %v989 = vunpack.c.l.b16 %v950
    %v990 = vunpack.c.l.b16 %v951
    %v991 = vunpack.c.l.b16 %v952
    %v992 = vunpack.c.l.b16 %v953
    %v993 = vunpack.c.l.b16 %v954
    %v994 = vunpack.c.l.b16 %v955
    %v995 = vunpack.c.l.b16 %v956
    %v996 = vunpack.c.l.b16 %v957
    %v997 = vunpack.c.l.b16 %v958
    %v998 = vunpack.c.l.b16 %v959
    %v999 = vunpack.c.l.b16 %v960
    %v1000 = vunpack.c.l.b16 %v961
    %v1001 = vunpack.c.l.b16 %v962
    %v1002 = vunpack.c.l.b16 %v963
    %v1003 = vunpack.c.l.b16 %v964
    %v1004 = vunpack.c.l.b16 %v965
    %v1005 = vpack.c.b16 %v990, %v989
    %v1006 = vpack.c.b16 %v992, %v991
    %v1007 = vpack.c.b16 %v994, %v993
    %v1008 = vpack.c.b16 %v996, %v995
    %v1009 = vpack.c.b16 %v998, %v997
    %v1010 = vpack.c.b16 %v1000, %v999
    %v1011 = vpack.c.b16 %v1002, %v1001
    %v1012 = vpack.c.b16 %v1004, %v1003
    %1021 = vmatprep.subr.bf16.mxu0 0
    %1022 = vmatpush1.bf16.msra.mxu0 %v1005
    %1023 = vmatprep.subr.bf16.mxu0 0
    %1024 = vmatpush1.bf16.msra.mxu0 %v1006
    %1025 = vmatprep.subr.bf16.mxu0 0
    %1026 = vmatpush1.bf16.msra.mxu0 %v1007
    %1027 = vmatprep.subr.bf16.mxu0 0
    %1028 = vmatpush1.bf16.msra.mxu0 %v1008
    %1029 = vmatprep.subr.bf16.mxu0 0
    %1030 = vmatpush1.bf16.msra.mxu0 %v1009
    %1031 = vmatprep.subr.bf16.mxu0 0
    %1032 = vmatpush1.bf16.msra.mxu0 %v1010
    %1033 = vmatprep.subr.bf16.mxu0 0
    %1034 = vmatpush1.bf16.msra.mxu0 %v1011
    %1035 = vmatprep.subr.bf16.mxu0 0
    %1036 = vmatpush1.bf16.msra.mxu0 %v1012
    %1037 = vmatprep.subr.bf16.mxu0 0
    %1038 = vmatpush1.bf16.msra.mxu0 0
    %1039 = vmatprep.subr.bf16.mxu0 0
    %1040 = vmatpush1.bf16.msra.mxu0 0
    %1041 = vmatprep.subr.bf16.mxu0 0
    %1042 = vmatpush1.bf16.msra.mxu0 0
    %1043 = vmatprep.subr.bf16.mxu0 0
    %1044 = vmatpush1.bf16.msra.mxu0 0
    %1045 = vmatprep.subr.bf16.mxu0 0
    %1046 = vmatpush1.bf16.msra.mxu0 0
    %1047 = vmatprep.subr.bf16.mxu0 0
    %1048 = vmatpush1.bf16.msra.mxu0 0
    %1049 = vmatprep.subr.bf16.mxu0 0
    %1050 = vmatpush1.bf16.msra.mxu0 0
    %1051 = vmatprep.subr.bf16.mxu0 0
    %1052 = vmatpush1.bf16.msra.mxu0 0
    %1053 = vmatprep.mubr.bf16.mxu0 0
    %1054 = vmatmul.mubr.bf16.gmra.mrb[0].mxu0 %v949
    %v1055 = vpop.f32.mrb[0].mxu0
    %v1056 = vadd.f32 %v971, %v1055
    %v1057 = vpop.f32.mrb[0].mxu0
    %v1058 = vpop.f32.mrb[0].mxu0
    %v1059 = vpop.f32.mrb[0].mxu0
    %1060 = vdwg.mxu0
    %vm1061 = vcmp.gt.f32.partialorder %v1056, 0.0
    %v1062 = vmul.f32 %v1056, 0.01
    %v1063 = vsel %vm1061, %v1056, %v1062
    %v1064 = vpack.c.bf16 %v1063, %v1063
    %v1065 = vld [vmem:[#allocation14] sm:$0xf]
    %v1066 = vld [vmem:[#allocation14 + $0x4] sm:$0xf]
    %v1067 = vld [vmem:[#allocation14 + $0x8] sm:$0xf]
    %v1068 = vld [vmem:[#allocation14 + $0xc] sm:$0xf]
    %v1069 = vld [vmem:[#allocation14 + $0x10] sm:$0xf]
    %v1070 = vld [vmem:[#allocation14 + $0x14] sm:$0xf]
    %v1071 = vld [vmem:[#allocation14 + $0x18] sm:$0xf]
    %v1072 = vld [vmem:[#allocation14 + $0x1c] sm:$0xf]
    %v1073 = vld [vmem:[#allocation14 + $0x20] sm:$0xf]
    %v1074 = vld [vmem:[#allocation14 + $0x24] sm:$0xf]
    %v1075 = vld [vmem:[#allocation14 + $0x28] sm:$0xf]
    %v1076 = vld [vmem:[#allocation14 + $0x2c] sm:$0xf]
    %v1077 = vld [vmem:[#allocation14 + $0x30] sm:$0xf]
    %v1078 = vld [vmem:[#allocation14 + $0x34] sm:$0xf]
    %v1079 = vld [vmem:[#allocation14 + $0x38] sm:$0xf]
    %v1080 = vld [vmem:[#allocation14 + $0x3c] sm:$0xf]
    %v1081 = vld [vmem:[%s11] sm:$0x1]
    %v1083 = vlaneseq
    %v1084 = vshrl.u32 %v1083, 7
    %v1085 = vsub.s32 0, %v1084
    %v1086 = vrot.slane %v1081, %v1085
    %v1104 = vunpack.c.l.b16 %v1065
    %v1105 = vunpack.c.l.b16 %v1066
    %v1106 = vunpack.c.l.b16 %v1067
    %v1107 = vunpack.c.l.b16 %v1068
    %v1108 = vunpack.c.l.b16 %v1069
    %v1109 = vunpack.c.l.b16 %v1070
    %v1110 = vunpack.c.l.b16 %v1071
    %v1111 = vunpack.c.l.b16 %v1072
    %v1112 = vunpack.c.l.b16 %v1073
    %v1113 = vunpack.c.l.b16 %v1074
    %v1114 = vunpack.c.l.b16 %v1075
    %v1115 = vunpack.c.l.b16 %v1076
    %v1116 = vunpack.c.l.b16 %v1077
    %v1117 = vunpack.c.l.b16 %v1078
    %v1118 = vunpack.c.l.b16 %v1079
    %v1119 = vunpack.c.l.b16 %v1080
    %v1120 = vpack.c.b16 %v1105, %v1104
    %v1121 = vpack.c.b16 %v1107, %v1106
    %v1122 = vpack.c.b16 %v1109, %v1108
    %v1123 = vpack.c.b16 %v1111, %v1110
    %v1124 = vpack.c.b16 %v1113, %v1112
    %v1125 = vpack.c.b16 %v1115, %v1114
    %v1126 = vpack.c.b16 %v1117, %v1116
    %v1127 = vpack.c.b16 %v1119, %v1118
    %1136 = vmatprep.subr.bf16.mxu0 0
    %1137 = vmatpush1.bf16.msra.mxu0 %v1120
    %1138 = vmatprep.subr.bf16.mxu0 0
    %1139 = vmatpush1.bf16.msra.mxu0 %v1121
    %1140 = vmatprep.subr.bf16.mxu0 0
    %1141 = vmatpush1.bf16.msra.mxu0 %v1122
    %1142 = vmatprep.subr.bf16.mxu0 0
    %1143 = vmatpush1.bf16.msra.mxu0 %v1123
    %1144 = vmatprep.subr.bf16.mxu0 0
    %1145 = vmatpush1.bf16.msra.mxu0 %v1124
    %1146 = vmatprep.subr.bf16.mxu0 0
    %1147 = vmatpush1.bf16.msra.mxu0 %v1125
    %1148 = vmatprep.subr.bf16.mxu0 0
    %1149 = vmatpush1.bf16.msra.mxu0 %v1126
    %1150 = vmatprep.subr.bf16.mxu0 0
    %1151 = vmatpush1.bf16.msra.mxu0 %v1127
    %1152 = vmatprep.subr.bf16.mxu0 0
    %1153 = vmatpush1.bf16.msra.mxu0 0
    %1154 = vmatprep.subr.bf16.mxu0 0
    %1155 = vmatpush1.bf16.msra.mxu0 0
    %1156 = vmatprep.subr.bf16.mxu0 0
    %1157 = vmatpush1.bf16.msra.mxu0 0
    %1158 = vmatprep.subr.bf16.mxu0 0
    %1159 = vmatpush1.bf16.msra.mxu0 0
    %1160 = vmatprep.subr.bf16.mxu0 0
    %1161 = vmatpush1.bf16.msra.mxu0 0
    %1162 = vmatprep.subr.bf16.mxu0 0
    %1163 = vmatpush1.bf16.msra.mxu0 0
    %1164 = vmatprep.subr.bf16.mxu0 0
    %1165 = vmatpush1.bf16.msra.mxu0 0
    %1166 = vmatprep.subr.bf16.mxu0 0
    %1167 = vmatpush1.bf16.msra.mxu0 0
    %1168 = vmatprep.mubr.bf16.mxu0 0
    %1169 = vmatmul.mubr.bf16.gmra.mrb[0].mxu0 %v1064
    %v1170 = vpop.f32.mrb[0].mxu0
    %v1171 = vadd.f32 %v1086, %v1170
    %v1172 = vpop.f32.mrb[0].mxu0
    %v1173 = vpop.f32.mrb[0].mxu0
    %v1174 = vpop.f32.mrb[0].mxu0
    %1175 = vdwg.mxu0
    %1176 = vst [vmem:[#allocation15] sm:$0x3] %v1171
    // Predicated region
    $region80: #{tpu_custom_call.1} parent=1 // pred_check
      _
    $region81: #{tpu_custom_call.1} parent=1 // pred_check_branch
      %1178 = sbr.rel (0) target = $region83
    $region82: #{tpu_custom_call.1} parent=1 // pred_region
      %s1180 = ssub.s32 32, 32
      %1181 = vsyncadd [#allocation8], %s1180
      %s1183 = sshll.u32 [#allocation15], 4
      %s1184 = int_to_ptr.vmem [resolvable:$true] %s1183
      %1186 = dma.vmem_to_hbm [thread:$0]  %s1184, 32, %s12, [#allocation8]
    $region83: #{tpu_custom_call.1} parent=1 // pred_fallthru
      _
    // Predicated region
    $region84: #{tpu_custom_call.1} parent=1 // pred_check
      _
    $region85: #{tpu_custom_call.1} parent=1 // pred_check_branch
      %1188 = sbr.rel (0) target = $region87
    $region86: #{tpu_custom_call.1} parent=1 // pred_region
      %1189 = dma.done [#allocation8], 32
    $region87: #{tpu_custom_call.1} parent=1 // pred_fallthru
      _
    %1190 = vsyncpa [#allocation7], 1
    %1191 = vsyncpa [#allocation10], 1
    %1192 = vsyncpa [#allocation13], 1
    %1193 = vsyncpa [#allocation8], 1
  %1194 = vsyncmov [#allocation3]
  %s1195 = vpop.sfrf %1194
  %p1196 = scmp.eq.s32.totalorder %s1195, 0
  %p1197 = pneg %p1196
  %1199 = shalt.err (%p1197)
  %s1200 = scalar_lea.sflag [#allocation3], 1
  %1201 = vsyncmov %s1200
  %s1202 = vpop.sfrf %1201
  %p1203 = scmp.eq.s32.totalorder %s1202, 0
  %p1204 = pneg %p1203
  %1206 = shalt.err (%p1204)
  %s1207 = scalar_lea.sflag [#allocation3], 2
  %1208 = vsyncmov %s1207
  %s1209 = vpop.sfrf %1208
  %p1210 = scmp.eq.s32.totalorder %s1209, 0
  %p1211 = pneg %p1210
  %1213 = shalt.err (%p1211)
  %s1214 = scalar_lea.sflag [#allocation3], 3
  %1215 = vsyncmov %s1214
  %s1216 = vpop.sfrf %1215
  %p1217 = scmp.eq.s32.totalorder %s1216, 0
  %p1218 = pneg %p1217
  %1220 = shalt.err (%p1218)
  %s1221 = scalar_lea.sflag [#allocation3], 4
  %1222 = vsyncmov %s1221
  %s1223 = vpop.sfrf %1222
  %p1224 = scmp.eq.s32.totalorder %s1223, 0
  %p1225 = pneg %p1224
  %1227 = shalt.err (%p1225)
  %s1228 = scalar_lea.sflag [#allocation3], 5
  %1229 = vsyncmov %s1228
  %s1230 = vpop.sfrf %1229
  %p1231 = scmp.eq.s32.totalorder %s1230, 0
  %p1232 = pneg %p1231
  %1234 = shalt.err (%p1232)
  %s1235 = scalar_lea.sflag [#allocation3], 6
  %1236 = vsyncmov %s1235
  %s1237 = vpop.sfrf %1236
  %p1238 = scmp.eq.s32.totalorder %s1237, 0
  %p1239 = pneg %p1238
  %1241 = shalt.err (%p1239)
  %s1242 = scalar_lea.sflag [#allocation3], 7
  %1243 = vsyncmov %s1242
  %s1244 = vpop.sfrf %1243
  %p1245 = scmp.eq.s32.totalorder %s1244, 0
  %p1246 = pneg %p1245
  %1248 = shalt.err (%p1246)
  %s1249 = scalar_lea.sflag [#allocation3], 8
  %1250 = vsyncmov %s1249
  %s1251 = vpop.sfrf %1250
  %p1252 = scmp.eq.s32.totalorder %s1251, 0
  %p1253 = pneg %p1252
  %1255 = shalt.err (%p1253)
  %s1256 = scalar_lea.sflag [#allocation3], 9
  %1257 = vsyncmov %s1256
  %s1258 = vpop.sfrf %1257
  %p1259 = scmp.eq.s32.totalorder %s1258, 0
  %p1260 = pneg %p1259
  %1262 = shalt.err (%p1260)
  %s1263 = scalar_lea.sflag [#allocation3], 10
  %1264 = vsyncmov %s1263
  %s1265 = vpop.sfrf %1264
  %p1266 = scmp.eq.s32.totalorder %s1265, 0
  %p1267 = pneg %p1266
  %1269 = shalt.err (%p1267)
  %s1270 = scalar_lea.sflag [#allocation3], 11
  %1271 = vsyncmov %s1270
  %s1272 = vpop.sfrf %1271
  %p1273 = scmp.eq.s32.totalorder %s1272, 0
  %p1274 = pneg %p1273
  %1276 = shalt.err (%p1274)
  %s1277 = scalar_lea.sflag [#allocation3], 12
  %1278 = vsyncmov %s1277
  %s1279 = vpop.sfrf %1278
  %p1280 = scmp.eq.s32.totalorder %s1279, 0
  %p1281 = pneg %p1280
  %1283 = shalt.err (%p1281)
  %s1284 = scalar_lea.sflag [#allocation3], 13
  %1285 = vsyncmov %s1284
  %s1286 = vpop.sfrf %1285
  %p1287 = scmp.eq.s32.totalorder %s1286, 0
  %p1288 = pneg %p1287
  %1290 = shalt.err (%p1288)
  %s1291 = scalar_lea.sflag [#allocation3], 14
  %1292 = vsyncmov %s1291
  %s1293 = vpop.sfrf %1292
  %p1294 = scmp.eq.s32.totalorder %s1293, 0
  %p1295 = pneg %p1294
  %1297 = shalt.err (%p1295)
  %s1298 = scalar_lea.sflag [#allocation3], 15
  %1299 = vsyncmov %s1298
  %s1300 = vpop.sfrf %1299
  %p1301 = scmp.eq.s32.totalorder %s1300, 0
  %p1302 = pneg %p1301
  %1304 = shalt.err (%p1302)
  %s1305 = scalar_lea.sflag [#allocation3], 16
  %1306 = vsyncmov %s1305
  %s1307 = vpop.sfrf %1306
  %p1308 = scmp.eq.s32.totalorder %s1307, 0
  %p1309 = pneg %p1308
  %1311 = shalt.err (%p1309)
  %s1312 = scalar_lea.sflag [#allocation3], 17
  %1313 = vsyncmov %s1312
  %s1314 = vpop.sfrf %1313
  %p1315 = scmp.eq.s32.totalorder %s1314, 0
  %p1316 = pneg %p1315
  %1318 = shalt.err (%p1316)
  %s1319 = scalar_lea.sflag [#allocation3], 18
  %1320 = vsyncmov %s1319
  %s1321 = vpop.sfrf %1320
  %p1322 = scmp.eq.s32.totalorder %s1321, 0
  %p1323 = pneg %p1322
  %1325 = shalt.err (%p1323)
  %s1326 = scalar_lea.sflag [#allocation3], 19
  %1327 = vsyncmov %s1326
  %s1328 = vpop.sfrf %1327
  %p1329 = scmp.eq.s32.totalorder %s1328, 0
  %p1330 = pneg %p1329
  %1332 = shalt.err (%p1330)
  %s1333 = scalar_lea.sflag [#allocation3], 20
  %1334 = vsyncmov %s1333
  %s1335 = vpop.sfrf %1334
  %p1336 = scmp.eq.s32.totalorder %s1335, 0
  %p1337 = pneg %p1336
  %1339 = shalt.err (%p1337)
  %s1340 = scalar_lea.sflag [#allocation3], 21
  %1341 = vsyncmov %s1340
  %s1342 = vpop.sfrf %1341
  %p1343 = scmp.eq.s32.totalorder %s1342, 0
  %p1344 = pneg %p1343
  %1346 = shalt.err (%p1344)
  %s1347 = scalar_lea.sflag [#allocation3], 22
  %1348 = vsyncmov %s1347
  %s1349 = vpop.sfrf %1348
  %p1350 = scmp.eq.s32.totalorder %s1349, 0
  %p1351 = pneg %p1350
  %1353 = shalt.err (%p1351)
  %s1354 = scalar_lea.sflag [#allocation3], 23
  %1355 = vsyncmov %s1354
  %s1356 = vpop.sfrf %1355
  %p1357 = scmp.eq.s32.totalorder %s1356, 0
  %p1358 = pneg %p1357
  %1360 = shalt.err (%p1358)
  %s1361 = scalar_lea.sflag [#allocation3], 24
  %1362 = vsyncmov %s1361
  %s1363 = vpop.sfrf %1362
  %p1364 = scmp.eq.s32.totalorder %s1363, 0
  %p1365 = pneg %p1364
  %1367 = shalt.err (%p1365)
  %s1368 = scalar_lea.sflag [#allocation3], 25
  %1369 = vsyncmov %s1368
  %s1370 = vpop.sfrf %1369
  %p1371 = scmp.eq.s32.totalorder %s1370, 0
  %p1372 = pneg %p1371
  %1374 = shalt.err (%p1372)
  %s1375 = scalar_lea.sflag [#allocation3], 26
  %1376 = vsyncmov %s1375
  %s1377 = vpop.sfrf %1376
  %p1378 = scmp.eq.s32.totalorder %s1377, 0
  %p1379 = pneg %p1378
  %1381 = shalt.err (%p1379)
  %s1382 = scalar_lea.sflag [#allocation3], 27
  %1383 = vsyncmov %s1382
  %s1384 = vpop.sfrf %1383
  %p1385 = scmp.eq.s32.totalorder %s1384, 0
  %p1386 = pneg %p1385
  %1388 = shalt.err (%p1386)
  %s1389 = scalar_lea.sflag [#allocation3], 28
  %1390 = vsyncmov %s1389
  %s1391 = vpop.sfrf %1390
  %p1392 = scmp.eq.s32.totalorder %s1391, 0
  %p1393 = pneg %p1392
  %1395 = shalt.err (%p1393)
  %s1396 = scalar_lea.sflag [#allocation3], 29
  %1397 = vsyncmov %s1396
  %s1398 = vpop.sfrf %1397
  %p1399 = scmp.eq.s32.totalorder %s1398, 0
  %p1400 = pneg %p1399
  %1402 = shalt.err (%p1400)
  %s1403 = scalar_lea.sflag [#allocation3], 30
  %1404 = vsyncmov %s1403
  %s1405 = vpop.sfrf %1404
  %p1406 = scmp.eq.s32.totalorder %s1405, 0
  %p1407 = pneg %p1406
  %1409 = shalt.err (%p1407)
  %s1410 = scalar_lea.sflag [#allocation3], 31
  %1411 = vsyncmov %s1410
  %s1412 = vpop.sfrf %1411
  %p1413 = scmp.eq.s32.totalorder %s1412, 0
  %p1414 = pneg %p1413
  %1416 = shalt.err (%p1414)

</llo_original>
